<compile_context>
chip_gen: v7x
topology: tpu7x:2x2x1
jax: 0.10.0
libtpu: 0.0.40
codegen_flags: <defaults>
</compile_context>

<pallas_src>
import functools

import jax
import jax.numpy as jnp
from jax.experimental import pallas as pl
from jax.experimental.pallas import tpu as pltpu

DROPOUT_P = 0.2
N_EMBED = 208  # matches the PyTorch module's n_embed


def _round_up(x, m):
    return (x + m - 1) // m * m


def _ffn_kernel(training, x_ref, w1_ref, b1_ref, w2_ref, b2_ref, *rest):
    # x_ref : (tm, Cp)  bf16      w1_ref: (Cp, Hp) bf16    b1_ref: (1, Hp) f32
    # w2_ref: (Hp, Cp)  bf16      b2_ref: (1, Cp)  f32
    # training: extra u_ref (tm, Cp) f32 uniform[0,1) for the dropout mask.
    if training:
        u_ref, o_ref = rest
    else:
        (o_ref,) = rest

    x = x_ref[...]
    h = jnp.dot(x, w1_ref[...], preferred_element_type=jnp.float32) + b1_ref[...]
    h = jnp.maximum(h, 0.0)                                    # ReLU
    y = jnp.dot(h.astype(jnp.bfloat16), w2_ref[...],
                preferred_element_type=jnp.float32) + b2_ref[...]
    if training:
        # inverted dropout: drop with prob p, scale survivors by 1/(1-p)
        keep = u_ref[...] >= DROPOUT_P
        y = jnp.where(keep, y * (1.0 / (1.0 - DROPOUT_P)), 0.0)
    o_ref[...] = y.astype(o_ref.dtype)


def feed_forward(x, params, *, training=False, seed=0, tm=512):
    """x: (B, T, C) float32.  params: (w1 (C,4C), b1 (1,4C), w2 (4C,C), b2 (1,C))."""
    w1, b1, w2, b2 = params
    B, T, C = x.shape
    H = w1.shape[1]

    # Lane-friendly padded feature sizes (multiples of 256 -> full MXU tiles,
    # unmasked lane stores).  Zero padding keeps the math identical.
    Cp = _round_up(C, 256)   # 208 -> 256
    Hp = _round_up(H, 256)   # 832 -> 1024

    M = B * T
    tm_eff = min(tm, _round_up(M, 8))       # single grid step when M is tiny
    M_pad = _round_up(M, tm_eff)

    x2 = jnp.pad(x.reshape(M, C), ((0, M_pad - M), (0, Cp - C))).astype(jnp.bfloat16)
    w1p = jnp.pad(w1, ((0, Cp - C), (0, Hp - H))).astype(jnp.bfloat16)
    b1p = jnp.pad(b1, ((0, 0), (0, Hp - H))).astype(jnp.float32)
    w2p = jnp.pad(w2, ((0, Hp - H), (0, Cp - C))).astype(jnp.bfloat16)
    b2p = jnp.pad(b2, ((0, 0), (0, Cp - C))).astype(jnp.float32)

    in_specs = [
        pl.BlockSpec((tm_eff, Cp), lambda i: (i, 0)),   # x row tile
        pl.BlockSpec((Cp, Hp), lambda i: (0, 0)),       # W1 (resident)
        pl.BlockSpec((1, Hp), lambda i: (0, 0)),        # b1
        pl.BlockSpec((Hp, Cp), lambda i: (0, 0)),       # W2 (resident)
        pl.BlockSpec((1, Cp), lambda i: (0, 0)),        # b2
    ]
    args = [x2, w1p, b1p, w2p, b2p]
    if training:
        # TODO(synk): dropout mask uses jax.random on the host (cannot bit-match
        # torch's RNG stream); statistics (p=0.2, inverted scaling) are identical.
        u = jax.random.uniform(jax.random.PRNGKey(seed), (M_pad, Cp), jnp.float32)
        in_specs.append(pl.BlockSpec((tm_eff, Cp), lambda i: (i, 0)))
        args.append(u)

    out = pl.pallas_call(
        functools.partial(_ffn_kernel, training),
        out_shape=jax.ShapeDtypeStruct((M_pad, Cp), jnp.float32),
        grid=(M_pad // tm_eff,),
        in_specs=in_specs,
        out_specs=pl.BlockSpec((tm_eff, Cp), lambda i: (i, 0)),
        compiler_params=pltpu.CompilerParams(
            dimension_semantics=("parallel",),        # rows independent -> both TCs on v7x
            vmem_limit_bytes=64 * 1024 * 1024),
    )(*args)
    return out[:M, :C].reshape(B, T, C)


def init_params(key, n_embed):
    """Deterministic init mimicking PyTorch nn.Linear default (U(-1/sqrt(in), 1/sqrt(in)))."""
    h = 4 * n_embed
    k1, k2, k3, k4 = jax.random.split(key, 4)
    b1_bound = 1.0 / jnp.sqrt(n_embed)
    b2_bound = 1.0 / jnp.sqrt(h)
    w1 = jax.random.uniform(k1, (n_embed, h), jnp.float32, -b1_bound, b1_bound)
    b1 = jax.random.uniform(k2, (1, h), jnp.float32, -b1_bound, b1_bound)
    w2 = jax.random.uniform(k3, (h, n_embed), jnp.float32, -b2_bound, b2_bound)
    b2 = jax.random.uniform(k4, (1, n_embed), jnp.float32, -b2_bound, b2_bound)
    return w1, b1, w2, b2


if __name__ == "__main__":
    key = jax.random.PRNGKey(0)
    kx, kp = jax.random.split(key)

    B, T, C = 2, 8, N_EMBED          # small shapes: batch=2, seq=8, n_embed=208
    x = jax.random.normal(kx, (B, T, C), dtype=jnp.float32)
    params = init_params(kp, C)

    # Eval-mode run (dropout = identity): check against a plain-JAX reference
    # computed with the same bf16-input / f32-accumulate precision.
    y = jax.block_until_ready(feed_forward(x, params, training=False))

    w1, b1, w2, b2 = params
    xb = x.reshape(-1, C).astype(jnp.bfloat16)
    h_ref = jnp.maximum(
        jnp.dot(xb, w1.astype(jnp.bfloat16), preferred_element_type=jnp.float32) + b1, 0.0)
    y_ref = jnp.dot(h_ref.astype(jnp.bfloat16), w2.astype(jnp.bfloat16),
                    preferred_element_type=jnp.float32) + b2
    y_ref = y_ref.reshape(B, T, C)
    assert y.shape == (B, T, C)
    assert jnp.allclose(y, y_ref, atol=1e-2, rtol=1e-2), "mismatch vs reference"

    # Training-mode run (dropout applied in-kernel from a host-sampled mask).
    y_train = jax.block_until_ready(feed_forward(x, params, training=True, seed=123))
    assert y_train.shape == (B, T, C)

    print("KERNEL_OK")
</pallas_src>

<mosaic_0001>
module attributes {stable_mosaic.version = 11 : i64} {
  func.func @_ffn_kernel(%arg0: i32, %arg1: memref<16x256xbf16, #tpu.memory_space<vmem>>, %arg2: memref<256x1024xbf16, #tpu.memory_space<vmem>>, %arg3: memref<1x1024xf32, #tpu.memory_space<vmem>>, %arg4: memref<1024x256xbf16, #tpu.memory_space<vmem>>, %arg5: memref<1x256xf32, #tpu.memory_space<vmem>>, %arg6: memref<16x256xf32, #tpu.memory_space<vmem>>) attributes {dimension_semantics = [#tpu.dimension_semantics<parallel>], iteration_bounds = array<i64: 1>, scalar_prefetch = 0 : i64, scratch_operands = 0 : i64, tpu.core_type = #tpu.core_type<tc>, window_params = [{transform_indices = @transform_0, window_bounds = array<i64: 16, 256>}, {pipeline_mode = #tpu.pipeline_mode<synchronous>, transform_indices = @transform_1, window_bounds = array<i64: 256, 1024>}, {pipeline_mode = #tpu.pipeline_mode<synchronous>, transform_indices = @transform_2, window_bounds = array<i64: 1, 1024>}, {pipeline_mode = #tpu.pipeline_mode<synchronous>, transform_indices = @transform_3, window_bounds = array<i64: 1024, 256>}, {pipeline_mode = #tpu.pipeline_mode<synchronous>, transform_indices = @transform_4, window_bounds = array<i64: 1, 256>}, {transform_indices = @transform_5, window_bounds = array<i64: 16, 256>}]} {
    %c0 = arith.constant 0 : index
    %c0_0 = arith.constant 0 : index
    %0 = vector.load %arg1[%c0, %c0_0] : memref<16x256xbf16, #tpu.memory_space<vmem>>, vector<16x256xbf16>
    %c0_1 = arith.constant 0 : index
    %c0_2 = arith.constant 0 : index
    %1 = vector.load %arg2[%c0_1, %c0_2] : memref<256x1024xbf16, #tpu.memory_space<vmem>>, vector<256x1024xbf16>
    %cst = arith.constant dense<0.000000e+00> : vector<16x1024xf32>
    %2 = tpu.matmul %0, %1, %cst {dimension_numbers = #tpu.dot_dimension_numbers<[1], [0], [0], [1], [0, 0, 1, 1], [], []>} : vector<16x256xbf16>, vector<256x1024xbf16>, vector<16x1024xf32> -> vector<16x1024xf32>
    %c0_3 = arith.constant 0 : index
    %c0_4 = arith.constant 0 : index
    %3 = vector.load %arg3[%c0_3, %c0_4] : memref<1x1024xf32, #tpu.memory_space<vmem>>, vector<1x1024xf32>
    %4 = vector.broadcast %3 : vector<1x1024xf32> to vector<16x1024xf32>
    %5 = arith.addf %2, %4 : vector<16x1024xf32>
    %cst_5 = arith.constant 0.000000e+00 : f32
    %6 = vector.broadcast %cst_5 : f32 to vector<16x1024xf32>
    %7 = arith.maximumf %5, %6 : vector<16x1024xf32>
    %8 = arith.truncf %7 : vector<16x1024xf32> to vector<16x1024xbf16>
    %c0_6 = arith.constant 0 : index
    %c0_7 = arith.constant 0 : index
    %9 = vector.load %arg4[%c0_6, %c0_7] : memref<1024x256xbf16, #tpu.memory_space<vmem>>, vector<1024x256xbf16>
    %cst_8 = arith.constant dense<0.000000e+00> : vector<16x256xf32>
    %10 = tpu.matmul %8, %9, %cst_8 {dimension_numbers = #tpu.dot_dimension_numbers<[1], [0], [0], [1], [0, 0, 1, 1], [], []>} : vector<16x1024xbf16>, vector<1024x256xbf16>, vector<16x256xf32> -> vector<16x256xf32>
    %c0_9 = arith.constant 0 : index
    %c0_10 = arith.constant 0 : index
    %11 = vector.load %arg5[%c0_9, %c0_10] : memref<1x256xf32, #tpu.memory_space<vmem>>, vector<1x256xf32>
    %12 = vector.broadcast %11 : vector<1x256xf32> to vector<16x256xf32>
    %13 = arith.addf %10, %12 : vector<16x256xf32>
    %c0_11 = arith.constant 0 : index
    %c0_12 = arith.constant 0 : index
    %14 = vector.load %arg6[%c0_11, %c0_12] : memref<16x256xf32, #tpu.memory_space<vmem>>, vector<16x256xf32>
    tpu.vector_store %arg6[%c0_11, %c0_12], %13 {strides = array<i32>} : memref<16x256xf32, #tpu.memory_space<vmem>>, vector<16x256xf32>,
    return
  }
  func.func @transform_0(%arg0: i32) -> (i32, i32) {
    %c0_i32 = arith.constant 0 : i32
    %c0_i32_0 = arith.constant 0 : i32
    return %arg0, %c0_i32 : i32, i32
  }
  func.func @transform_1(%arg0: i32) -> (i32, i32) {
    %c0_i32 = arith.constant 0 : i32
    %c0_i32_0 = arith.constant 0 : i32
    %c0_i32_1 = arith.constant 0 : i32
    return %c0_i32, %c0_i32_0 : i32, i32
  }
  func.func @transform_2(%arg0: i32) -> (i32, i32) {
    %c0_i32 = arith.constant 0 : i32
    %c0_i32_0 = arith.constant 0 : i32
    %c0_i32_1 = arith.constant 0 : i32
    return %c0_i32, %c0_i32_0 : i32, i32
  }
  func.func @transform_3(%arg0: i32) -> (i32, i32) {
    %c0_i32 = arith.constant 0 : i32
    %c0_i32_0 = arith.constant 0 : i32
    %c0_i32_1 = arith.constant 0 : i32
    return %c0_i32, %c0_i32_0 : i32, i32
  }
  func.func @transform_4(%arg0: i32) -> (i32, i32) {
    %c0_i32 = arith.constant 0 : i32
    %c0_i32_0 = arith.constant 0 : i32
    %c0_i32_1 = arith.constant 0 : i32
    return %c0_i32, %c0_i32_0 : i32, i32
  }
  func.func @transform_5(%arg0: i32) -> (i32, i32) {
    %c0_i32 = arith.constant 0 : i32
    %c0_i32_0 = arith.constant 0 : i32
    return %arg0, %c0_i32 : i32, i32
  }
}

</mosaic_0001>

<llo_original>
// kernel: tpu_custom_call.1
$region0: #{tpu_custom_call.1}
  #allocation0 [shape = 'u32[]', space=smem, size = 0x4, offset = 0x4, fixed_abs, tag = 'smem constant byte address 0x4 - core index']
  #allocation1 [shape = 'u32[144,128]{1,0:T(1,128)}', space=vmem, size = 0x12000, scoped, tag = 'internal scratch']
  %s0 = inlined_call_operand.hbm [shape: bf16[16,256], index: 0, kind: input, shape index: {}]
  %s1 = inlined_call_operand.hbm [shape: bf16[256,1024], index: 1, kind: input, shape index: {}]
  %s2 = inlined_call_operand.hbm [shape: f32[1,1024], index: 2, kind: input, shape index: {}]
  %s3 = inlined_call_operand.hbm [shape: bf16[1024,256], index: 3, kind: input, shape index: {}]
  %s4 = inlined_call_operand.hbm [shape: f32[1,256], index: 4, kind: input, shape index: {}]
  %s5 = inlined_call_operand.hbm [shape: f32[16,256], index: 5, kind: output, shape index: {}]
  %s6 = sld [smem:[#allocation0]]
  $region50: #{tpu_custom_call.1} parent=0
    _
  %s8 = ssub.s32 1, %s6
  %s9 = scalar_select 0, %s8, %s6
  $region1: #{tpu_custom_call.1} parent=0
    #allocation2 [shape = 'u8[8192]{0}', space=vmem, size = 0x2000, scoped, tag = 'input window, operand 0, single buffered']
    #allocation3 [shape = 's32[1]{0}', space=sflag, size = 0x4, scoped, tag = 'scoped memory for tpu_custom_call.1']
    #allocation4 [shape = 's32[1]{0}', space=sflag, size = 0x4, scoped, tag = 'scoped memory for tpu_custom_call.1']
    #allocation5 [shape = 'u8[524288]{0}', space=vmem, size = 0x80000, scoped, tag = 'input window, operand 1, single buffered']
    #allocation6 [shape = 's32[1]{0}', space=sflag, size = 0x4, scoped, tag = 'scoped memory for tpu_custom_call.1']
    #allocation7 [shape = 'u8[4096]{0}', space=vmem, size = 0x1000, scoped, tag = 'input window, operand 2, single buffered']
    #allocation8 [shape = 'u8[524288]{0}', space=vmem, size = 0x80000, scoped, tag = 'input window, operand 3, single buffered']
    #allocation9 [shape = 's32[1]{0}', space=sflag, size = 0x4, scoped, tag = 'scoped memory for tpu_custom_call.1']
    #allocation10 [shape = 'u8[1024]{0}', space=vmem, size = 0x400, scoped, tag = 'input window, operand 4, single buffered']
    #allocation11 [shape = 'u8[16384]{0}', space=vmem, size = 0x4000, scoped, tag = 'output window, operand 0, single buffered']
    %10 = vsyncpa [#allocation3], 0
    %11 = vsyncpa [#allocation6], 0
    %12 = vsyncpa [#allocation9], 0
    %13 = vsyncpa [#allocation4], 0
    // Predicated region
    $region2: #{tpu_custom_call.1} parent=1 // pred_check
      _
    $region3: #{tpu_custom_call.1} parent=1 // pred_check_branch
      %15 = sbr.rel (0) target = $region5
    $region4: #{tpu_custom_call.1} parent=1 // pred_region
      %s17 = ssub.s32 256, 256
      %18 = vsyncadd [#allocation3], %s17
      %s19 = sshll.u32 [#allocation2], 4
      %s20 = int_to_ptr.vmem [resolvable:$true] %s19
      %25 = dma.hbm_to_vmem [thread:$0]  %s0, 256, %s20, [#allocation3], 128, 128, 8
    $region5: #{tpu_custom_call.1} parent=1 // pred_fallthru
      _
    // Predicated region
    $region6: #{tpu_custom_call.1} parent=1 // pred_check
      _
    $region7: #{tpu_custom_call.1} parent=1 // pred_check_branch
      %27 = sbr.rel (0) target = $region9
    $region8: #{tpu_custom_call.1} parent=1 // pred_region
      %s29 = ssub.s32 16384, 16384
      %30 = vsyncadd [#allocation6], %s29
      %s31 = sshll.u32 [#allocation5], 4
      %s32 = int_to_ptr.vmem [resolvable:$true] %s31
      %37 = dma.hbm_to_vmem [thread:$0]  %s1, 16384, %s32, [#allocation6], 512, 512, 32
    $region9: #{tpu_custom_call.1} parent=1 // pred_fallthru
      _
    // Predicated region
    $region10: #{tpu_custom_call.1} parent=1 // pred_check
      _
    $region11: #{tpu_custom_call.1} parent=1 // pred_check_branch
      %39 = sbr.rel (0) target = $region13
    $region12: #{tpu_custom_call.1} parent=1 // pred_region
      %s41 = ssub.s32 128, 128
      %42 = vsyncadd [#allocation6], %s41
      %s44 = sshll.u32 [#allocation7], 4
      %s45 = int_to_ptr.vmem [resolvable:$true] %s44
      %47 = dma.hbm_to_vmem [thread:$0]  %s2, 128, %s45, [#allocation6]
    $region13: #{tpu_custom_call.1} parent=1 // pred_fallthru
      _
    // Predicated region
    $region14: #{tpu_custom_call.1} parent=1 // pred_check
      _
    $region15: #{tpu_custom_call.1} parent=1 // pred_check_branch
      %49 = sbr.rel (0) target = $region17
    $region16: #{tpu_custom_call.1} parent=1 // pred_region
      %s51 = ssub.s32 16384, 16384
      %52 = vsyncadd [#allocation9], %s51
      %s53 = sshll.u32 [#allocation8], 4
      %s54 = int_to_ptr.vmem [resolvable:$true] %s53
      %59 = dma.hbm_to_vmem [thread:$0]  %s3, 16384, %s54, [#allocation9], 128, 128, 8
    $region17: #{tpu_custom_call.1} parent=1 // pred_fallthru
      _
    // Predicated region
    $region18: #{tpu_custom_call.1} parent=1 // pred_check
      _
    $region19: #{tpu_custom_call.1} parent=1 // pred_check_branch
      %61 = sbr.rel (0) target = $region21
    $region20: #{tpu_custom_call.1} parent=1 // pred_region
      %s63 = ssub.s32 32, 32
      %64 = vsyncadd [#allocation9], %s63
      %s66 = sshll.u32 [#allocation10], 4
      %s67 = int_to_ptr.vmem [resolvable:$true] %s66
      %69 = dma.hbm_to_vmem [thread:$0]  %s4, 32, %s67, [#allocation9]
    $region21: #{tpu_custom_call.1} parent=1 // pred_fallthru
      _
    // Predicated region
    $region22: #{tpu_custom_call.1} parent=1 // pred_check
      _
    $region23: #{tpu_custom_call.1} parent=1 // pred_check_branch
      %71 = sbr.rel (0) target = $region25
    $region24: #{tpu_custom_call.1} parent=1 // pred_region
      %72 = dma.done [#allocation3], 256
    $region25: #{tpu_custom_call.1} parent=1 // pred_fallthru
      _
    // Predicated region
    $region26: #{tpu_custom_call.1} parent=1 // pred_check
      _
    $region27: #{tpu_custom_call.1} parent=1 // pred_check_branch
      %74 = sbr.rel (0) target = $region29
    $region28: #{tpu_custom_call.1} parent=1 // pred_region
      %75 = dma.done [#allocation6], 16384
    $region29: #{tpu_custom_call.1} parent=1 // pred_fallthru
      _
    // Predicated region
    $region30: #{tpu_custom_call.1} parent=1 // pred_check
      _
    $region31: #{tpu_custom_call.1} parent=1 // pred_check_branch
      %77 = sbr.rel (0) target = $region33
    $region32: #{tpu_custom_call.1} parent=1 // pred_region
      %78 = dma.done [#allocation6], 128
    $region33: #{tpu_custom_call.1} parent=1 // pred_fallthru
      _
    // Predicated region
    $region34: #{tpu_custom_call.1} parent=1 // pred_check
      _
    $region35: #{tpu_custom_call.1} parent=1 // pred_check_branch
      %80 = sbr.rel (0) target = $region37
    $region36: #{tpu_custom_call.1} parent=1 // pred_region
      %81 = dma.done [#allocation9], 16384
    $region37: #{tpu_custom_call.1} parent=1 // pred_fallthru
      _
    // Predicated region
    $region38: #{tpu_custom_call.1} parent=1 // pred_check
      _
    $region39: #{tpu_custom_call.1} parent=1 // pred_check_branch
      %83 = sbr.rel (0) target = $region41
    $region40: #{tpu_custom_call.1} parent=1 // pred_region
      %84 = dma.done [#allocation9], 32
    $region41: #{tpu_custom_call.1} parent=1 // pred_fallthru
      _
    %v85 = vld [vmem:[#allocation2] sm:$0xff]
    %v86 = vld [vmem:[#allocation2 + $0x8] sm:$0xff]
    %v87 = vld [vmem:[#allocation5] sm:$0xff]
    %v88 = vld [vmem:[#allocation5 + $0x8] sm:$0xff]
    %v89 = vld [vmem:[#allocation5 + $0x10] sm:$0xff]
    %v90 = vld [vmem:[#allocation5 + $0x18] sm:$0xff]
    %v91 = vld [vmem:[#allocation5 + $0x20] sm:$0xff]
    %v92 = vld [vmem:[#allocation5 + $0x28] sm:$0xff]
    %v93 = vld [vmem:[#allocation5 + $0x30] sm:$0xff]
    %v94 = vld [vmem:[#allocation5 + $0x38] sm:$0xff]
    %v95 = vld [vmem:[#allocation5 + $0x40] sm:$0xff]
    %v96 = vld [vmem:[#allocation5 + $0x48] sm:$0xff]
    %v97 = vld [vmem:[#allocation5 + $0x50] sm:$0xff]
    %v98 = vld [vmem:[#allocation5 + $0x58] sm:$0xff]
    %v99 = vld [vmem:[#allocation5 + $0x60] sm:$0xff]
    %v100 = vld [vmem:[#allocation5 + $0x68] sm:$0xff]
    %v101 = vld [vmem:[#allocation5 + $0x70] sm:$0xff]
    %v102 = vld [vmem:[#allocation5 + $0x78] sm:$0xff]
    %v103 = vld [vmem:[#allocation5 + $0x80] sm:$0xff]
    %v104 = vld [vmem:[#allocation5 + $0x88] sm:$0xff]
    %v105 = vld [vmem:[#allocation5 + $0x90] sm:$0xff]
    %v106 = vld [vmem:[#allocation5 + $0x98] sm:$0xff]
    %v107 = vld [vmem:[#allocation5 + $0xa0] sm:$0xff]
    %v108 = vld [vmem:[#allocation5 + $0xa8] sm:$0xff]
    %v109 = vld [vmem:[#allocation5 + $0xb0] sm:$0xff]
    %v110 = vld [vmem:[#allocation5 + $0xb8] sm:$0xff]
    %v111 = vld [vmem:[#allocation5 + $0xc0] sm:$0xff]
    %v112 = vld [vmem:[#allocation5 + $0xc8] sm:$0xff]
    %v113 = vld [vmem:[#allocation5 + $0xd0] sm:$0xff]
    %v114 = vld [vmem:[#allocation5 + $0xd8] sm:$0xff]
    %v115 = vld [vmem:[#allocation5 + $0xe0] sm:$0xff]
    %v116 = vld [vmem:[#allocation5 + $0xe8] sm:$0xff]
    %v117 = vld [vmem:[#allocation5 + $0xf0] sm:$0xff]
    %v118 = vld [vmem:[#allocation5 + $0xf8] sm:$0xff]
    %v119 = vld [vmem:[#allocation5 + $0x100] sm:$0xff]
    %v120 = vld [vmem:[#allocation5 + $0x108] sm:$0xff]
    %v121 = vld [vmem:[#allocation5 + $0x110] sm:$0xff]
    %v122 = vld [vmem:[#allocation5 + $0x118] sm:$0xff]
    %v123 = vld [vmem:[#allocation5 + $0x120] sm:$0xff]
    %v124 = vld [vmem:[#allocation5 + $0x128] sm:$0xff]
    %v125 = vld [vmem:[#allocation5 + $0x130] sm:$0xff]
    %v126 = vld [vmem:[#allocation5 + $0x138] sm:$0xff]
    %v127 = vld [vmem:[#allocation5 + $0x140] sm:$0xff]
    %v128 = vld [vmem:[#allocation5 + $0x148] sm:$0xff]
    %v129 = vld [vmem:[#allocation5 + $0x150] sm:$0xff]
    %v130 = vld [vmem:[#allocation5 + $0x158] sm:$0xff]
    %v131 = vld [vmem:[#allocation5 + $0x160] sm:$0xff]
    %v132 = vld [vmem:[#allocation5 + $0x168] sm:$0xff]
    %v133 = vld [vmem:[#allocation5 + $0x170] sm:$0xff]
    %v134 = vld [vmem:[#allocation5 + $0x178] sm:$0xff]
    %v135 = vld [vmem:[#allocation5 + $0x180] sm:$0xff]
    %v136 = vld [vmem:[#allocation5 + $0x188] sm:$0xff]
    %v137 = vld [vmem:[#allocation5 + $0x190] sm:$0xff]
    %v138 = vld [vmem:[#allocation5 + $0x198] sm:$0xff]
    %v139 = vld [vmem:[#allocation5 + $0x1a0] sm:$0xff]
    %v140 = vld [vmem:[#allocation5 + $0x1a8] sm:$0xff]
    %v141 = vld [vmem:[#allocation5 + $0x1b0] sm:$0xff]
    %v142 = vld [vmem:[#allocation5 + $0x1b8] sm:$0xff]
    %v143 = vld [vmem:[#allocation5 + $0x1c0] sm:$0xff]
    %v144 = vld [vmem:[#allocation5 + $0x1c8] sm:$0xff]
    %v145 = vld [vmem:[#allocation5 + $0x1d0] sm:$0xff]
    %v146 = vld [vmem:[#allocation5 + $0x1d8] sm:$0xff]
    %v147 = vld [vmem:[#allocation5 + $0x1e0] sm:$0xff]
    %v148 = vld [vmem:[#allocation5 + $0x1e8] sm:$0xff]
    %v149 = vld [vmem:[#allocation5 + $0x1f0] sm:$0xff]
    %v150 = vld [vmem:[#allocation5 + $0x1f8] sm:$0xff]
    %v151 = vld [vmem:[#allocation5 + $0x200] sm:$0xff]
    %v152 = vld [vmem:[#allocation5 + $0x208] sm:$0xff]
    %v153 = vld [vmem:[#allocation5 + $0x210] sm:$0xff]
    %v154 = vld [vmem:[#allocation5 + $0x218] sm:$0xff]
    %v155 = vld [vmem:[#allocation5 + $0x220] sm:$0xff]
    %v156 = vld [vmem:[#allocation5 + $0x228] sm:$0xff]
    %v157 = vld [vmem:[#allocation5 + $0x230] sm:$0xff]
    %v158 = vld [vmem:[#allocation5 + $0x238] sm:$0xff]
    %v159 = vld [vmem:[#allocation5 + $0x240] sm:$0xff]
    %v160 = vld [vmem:[#allocation5 + $0x248] sm:$0xff]
    %v161 = vld [vmem:[#allocation5 + $0x250] sm:$0xff]
    %v162 = vld [vmem:[#allocation5 + $0x258] sm:$0xff]
    %v163 = vld [vmem:[#allocation5 + $0x260] sm:$0xff]
    %v164 = vld [vmem:[#allocation5 + $0x268] sm:$0xff]
    %v165 = vld [vmem:[#allocation5 + $0x270] sm:$0xff]
    %v166 = vld [vmem:[#allocation5 + $0x278] sm:$0xff]
    %v167 = vld [vmem:[#allocation5 + $0x280] sm:$0xff]
    %v168 = vld [vmem:[#allocation5 + $0x288] sm:$0xff]
    %v169 = vld [vmem:[#allocation5 + $0x290] sm:$0xff]
    %v170 = vld [vmem:[#allocation5 + $0x298] sm:$0xff]
    %v171 = vld [vmem:[#allocation5 + $0x2a0] sm:$0xff]
    %v172 = vld [vmem:[#allocation5 + $0x2a8] sm:$0xff]
    %v173 = vld [vmem:[#allocation5 + $0x2b0] sm:$0xff]
    %v174 = vld [vmem:[#allocation5 + $0x2b8] sm:$0xff]
    %v175 = vld [vmem:[#allocation5 + $0x2c0] sm:$0xff]
    %v176 = vld [vmem:[#allocation5 + $0x2c8] sm:$0xff]
    %v177 = vld [vmem:[#allocation5 + $0x2d0] sm:$0xff]
    %v178 = vld [vmem:[#allocation5 + $0x2d8] sm:$0xff]
    %v179 = vld [vmem:[#allocation5 + $0x2e0] sm:$0xff]
    %v180 = vld [vmem:[#allocation5 + $0x2e8] sm:$0xff]
    %v181 = vld [vmem:[#allocation5 + $0x2f0] sm:$0xff]
    %v182 = vld [vmem:[#allocation5 + $0x2f8] sm:$0xff]
    %v183 = vld [vmem:[#allocation5 + $0x300] sm:$0xff]
    %v184 = vld [vmem:[#allocation5 + $0x308] sm:$0xff]
    %v185 = vld [vmem:[#allocation5 + $0x310] sm:$0xff]
    %v186 = vld [vmem:[#allocation5 + $0x318] sm:$0xff]
    %v187 = vld [vmem:[#allocation5 + $0x320] sm:$0xff]
    %v188 = vld [vmem:[#allocation5 + $0x328] sm:$0xff]
    %v189 = vld [vmem:[#allocation5 + $0x330] sm:$0xff]
    %v190 = vld [vmem:[#allocation5 + $0x338] sm:$0xff]
    %v191 = vld [vmem:[#allocation5 + $0x340] sm:$0xff]
    %v192 = vld [vmem:[#allocation5 + $0x348] sm:$0xff]
    %v193 = vld [vmem:[#allocation5 + $0x350] sm:$0xff]
    %v194 = vld [vmem:[#allocation5 + $0x358] sm:$0xff]
    %v195 = vld [vmem:[#allocation5 + $0x360] sm:$0xff]
    %v196 = vld [vmem:[#allocation5 + $0x368] sm:$0xff]
    %v197 = vld [vmem:[#allocation5 + $0x370] sm:$0xff]
    %v198 = vld [vmem:[#allocation5 + $0x378] sm:$0xff]
    %v199 = vld [vmem:[#allocation5 + $0x380] sm:$0xff]
    %v200 = vld [vmem:[#allocation5 + $0x388] sm:$0xff]
    %v201 = vld [vmem:[#allocation5 + $0x390] sm:$0xff]
    %v202 = vld [vmem:[#allocation5 + $0x398] sm:$0xff]
    %v203 = vld [vmem:[#allocation5 + $0x3a0] sm:$0xff]
    %v204 = vld [vmem:[#allocation5 + $0x3a8] sm:$0xff]
    %v205 = vld [vmem:[#allocation5 + $0x3b0] sm:$0xff]
    %v206 = vld [vmem:[#allocation5 + $0x3b8] sm:$0xff]
    %v207 = vld [vmem:[#allocation5 + $0x3c0] sm:$0xff]
    %v208 = vld [vmem:[#allocation5 + $0x3c8] sm:$0xff]
    %v209 = vld [vmem:[#allocation5 + $0x3d0] sm:$0xff]
    %v210 = vld [vmem:[#allocation5 + $0x3d8] sm:$0xff]
    %v211 = vld [vmem:[#allocation5 + $0x3e0] sm:$0xff]
    %v212 = vld [vmem:[#allocation5 + $0x3e8] sm:$0xff]
    %v213 = vld [vmem:[#allocation5 + $0x3f0] sm:$0xff]
    %v214 = vld [vmem:[#allocation5 + $0x3f8] sm:$0xff]
    %v215 = vld [vmem:[#allocation7] sm:$0xff]
    %v217 = vlaneseq
    %v218 = vshrl.u32 %v217, 7
    %v219 = vsub.s32 0, %v218
    %v220 = vrot.slane %v215, %v219
    %v221 = vlaneseq
    %v222 = vshrl.u32 %v221, 7
    %v223 = vsub.s32 1, %v222
    %v224 = vrot.slane %v215, %v223
    %v225 = vlaneseq
    %v226 = vshrl.u32 %v225, 7
    %v227 = vsub.s32 2, %v226
    %v228 = vrot.slane %v215, %v227
    %v229 = vlaneseq
    %v230 = vshrl.u32 %v229, 7
    %v231 = vsub.s32 3, %v230
    %v232 = vrot.slane %v215, %v231
    %v233 = vlaneseq
    %v234 = vshrl.u32 %v233, 7
    %v235 = vsub.s32 4, %v234
    %v236 = vrot.slane %v215, %v235
    %v237 = vlaneseq
    %v238 = vshrl.u32 %v237, 7
    %v239 = vsub.s32 5, %v238
    %v240 = vrot.slane %v215, %v239
    %v241 = vlaneseq
    %v242 = vshrl.u32 %v241, 7
    %v243 = vsub.s32 6, %v242
    %v244 = vrot.slane %v215, %v243
    %v245 = vlaneseq
    %v246 = vshrl.u32 %v245, 7
    %v247 = vsub.s32 7, %v246
    %v248 = vrot.slane %v215, %v247
    %v259 = vunpack.c.l.b16 %v85
    %v260 = vunpack.c.h.b16 %v85
    %v261 = vunpack.c.l.b16 %v86
    %v262 = vunpack.c.h.b16 %v86
    %v263 = vpack.c.b16 %v261, %v259
    %v264 = vpack.c.b16 %v262, %v260
    %v395 = vunpack.c.l.b16 %v87
    %v396 = vunpack.c.h.b16 %v87
    %v397 = vunpack.c.l.b16 %v88
    %v398 = vunpack.c.h.b16 %v88
    %v399 = vunpack.c.l.b16 %v89
    %v400 = vunpack.c.h.b16 %v89
    %v401 = vunpack.c.l.b16 %v90
    %v402 = vunpack.c.h.b16 %v90
    %v403 = vunpack.c.l.b16 %v91
    %v404 = vunpack.c.h.b16 %v91
    %v405 = vunpack.c.l.b16 %v92
    %v406 = vunpack.c.h.b16 %v92
    %v407 = vunpack.c.l.b16 %v93
    %v408 = vunpack.c.h.b16 %v93
    %v409 = vunpack.c.l.b16 %v94
    %v410 = vunpack.c.h.b16 %v94
    %v411 = vunpack.c.l.b16 %v95
    %v412 = vunpack.c.h.b16 %v95
    %v413 = vunpack.c.l.b16 %v96
    %v414 = vunpack.c.h.b16 %v96
    %v415 = vunpack.c.l.b16 %v97
    %v416 = vunpack.c.h.b16 %v97
    %v417 = vunpack.c.l.b16 %v98
    %v418 = vunpack.c.h.b16 %v98
    %v419 = vunpack.c.l.b16 %v99
    %v420 = vunpack.c.h.b16 %v99
    %v421 = vunpack.c.l.b16 %v100
    %v422 = vunpack.c.h.b16 %v100
    %v423 = vunpack.c.l.b16 %v101
    %v424 = vunpack.c.h.b16 %v101
    %v425 = vunpack.c.l.b16 %v102
    %v426 = vunpack.c.h.b16 %v102
    %v427 = vunpack.c.l.b16 %v103
    %v428 = vunpack.c.h.b16 %v103
    %v429 = vunpack.c.l.b16 %v104
    %v430 = vunpack.c.h.b16 %v104
    %v431 = vunpack.c.l.b16 %v105
    %v432 = vunpack.c.h.b16 %v105
    %v433 = vunpack.c.l.b16 %v106
    %v434 = vunpack.c.h.b16 %v106
    %v435 = vunpack.c.l.b16 %v107
    %v436 = vunpack.c.h.b16 %v107
    %v437 = vunpack.c.l.b16 %v108
    %v438 = vunpack.c.h.b16 %v108
    %v439 = vunpack.c.l.b16 %v109
    %v440 = vunpack.c.h.b16 %v109
    %v441 = vunpack.c.l.b16 %v110
    %v442 = vunpack.c.h.b16 %v110
    %v443 = vunpack.c.l.b16 %v111
    %v444 = vunpack.c.h.b16 %v111
    %v445 = vunpack.c.l.b16 %v112
    %v446 = vunpack.c.h.b16 %v112
    %v447 = vunpack.c.l.b16 %v113
    %v448 = vunpack.c.h.b16 %v113
    %v449 = vunpack.c.l.b16 %v114
    %v450 = vunpack.c.h.b16 %v114
    %v451 = vunpack.c.l.b16 %v115
    %v452 = vunpack.c.h.b16 %v115
    %v453 = vunpack.c.l.b16 %v116
    %v454 = vunpack.c.h.b16 %v116
    %v455 = vunpack.c.l.b16 %v117
    %v456 = vunpack.c.h.b16 %v117
    %v457 = vunpack.c.l.b16 %v118
    %v458 = vunpack.c.h.b16 %v118
    %v459 = vunpack.c.l.b16 %v119
    %v460 = vunpack.c.h.b16 %v119
    %v461 = vunpack.c.l.b16 %v120
    %v462 = vunpack.c.h.b16 %v120
    %v463 = vunpack.c.l.b16 %v121
    %v464 = vunpack.c.h.b16 %v121
    %v465 = vunpack.c.l.b16 %v122
    %v466 = vunpack.c.h.b16 %v122
    %v467 = vunpack.c.l.b16 %v123
    %v468 = vunpack.c.h.b16 %v123
    %v469 = vunpack.c.l.b16 %v124
    %v470 = vunpack.c.h.b16 %v124
    %v471 = vunpack.c.l.b16 %v125
    %v472 = vunpack.c.h.b16 %v125
    %v473 = vunpack.c.l.b16 %v126
    %v474 = vunpack.c.h.b16 %v126
    %v475 = vunpack.c.l.b16 %v127
    %v476 = vunpack.c.h.b16 %v127
    %v477 = vunpack.c.l.b16 %v128
    %v478 = vunpack.c.h.b16 %v128
    %v479 = vunpack.c.l.b16 %v129
    %v480 = vunpack.c.h.b16 %v129
    %v481 = vunpack.c.l.b16 %v130
    %v482 = vunpack.c.h.b16 %v130
    %v483 = vunpack.c.l.b16 %v131
    %v484 = vunpack.c.h.b16 %v131
    %v485 = vunpack.c.l.b16 %v132
    %v486 = vunpack.c.h.b16 %v132
    %v487 = vunpack.c.l.b16 %v133
    %v488 = vunpack.c.h.b16 %v133
    %v489 = vunpack.c.l.b16 %v134
    %v490 = vunpack.c.h.b16 %v134
    %v491 = vunpack.c.l.b16 %v135
    %v492 = vunpack.c.h.b16 %v135
    %v493 = vunpack.c.l.b16 %v136
    %v494 = vunpack.c.h.b16 %v136
    %v495 = vunpack.c.l.b16 %v137
    %v496 = vunpack.c.h.b16 %v137
    %v497 = vunpack.c.l.b16 %v138
    %v498 = vunpack.c.h.b16 %v138
    %v499 = vunpack.c.l.b16 %v139
    %v500 = vunpack.c.h.b16 %v139
    %v501 = vunpack.c.l.b16 %v140
    %v502 = vunpack.c.h.b16 %v140
    %v503 = vunpack.c.l.b16 %v141
    %v504 = vunpack.c.h.b16 %v141
    %v505 = vunpack.c.l.b16 %v142
    %v506 = vunpack.c.h.b16 %v142
    %v507 = vunpack.c.l.b16 %v143
    %v508 = vunpack.c.h.b16 %v143
    %v509 = vunpack.c.l.b16 %v144
    %v510 = vunpack.c.h.b16 %v144
    %v511 = vunpack.c.l.b16 %v145
    %v512 = vunpack.c.h.b16 %v145
    %v513 = vunpack.c.l.b16 %v146
    %v514 = vunpack.c.h.b16 %v146
    %v515 = vunpack.c.l.b16 %v147
    %v516 = vunpack.c.h.b16 %v147
    %v517 = vunpack.c.l.b16 %v148
    %v518 = vunpack.c.h.b16 %v148
    %v519 = vunpack.c.l.b16 %v149
    %v520 = vunpack.c.h.b16 %v149
    %v521 = vunpack.c.l.b16 %v150
    %v522 = vunpack.c.h.b16 %v150
    %v523 = vunpack.c.l.b16 %v151
    %v524 = vunpack.c.h.b16 %v151
    %v525 = vunpack.c.l.b16 %v152
    %v526 = vunpack.c.h.b16 %v152
    %v527 = vunpack.c.l.b16 %v153
    %v528 = vunpack.c.h.b16 %v153
    %v529 = vunpack.c.l.b16 %v154
    %v530 = vunpack.c.h.b16 %v154
    %v531 = vunpack.c.l.b16 %v155
    %v532 = vunpack.c.h.b16 %v155
    %v533 = vunpack.c.l.b16 %v156
    %v534 = vunpack.c.h.b16 %v156
    %v535 = vunpack.c.l.b16 %v157
    %v536 = vunpack.c.h.b16 %v157
    %v537 = vunpack.c.l.b16 %v158
    %v538 = vunpack.c.h.b16 %v158
    %v539 = vunpack.c.l.b16 %v159
    %v540 = vunpack.c.h.b16 %v159
    %v541 = vunpack.c.l.b16 %v160
    %v542 = vunpack.c.h.b16 %v160
    %v543 = vunpack.c.l.b16 %v161
    %v544 = vunpack.c.h.b16 %v161
    %v545 = vunpack.c.l.b16 %v162
    %v546 = vunpack.c.h.b16 %v162
    %v547 = vunpack.c.l.b16 %v163
    %v548 = vunpack.c.h.b16 %v163
    %v549 = vunpack.c.l.b16 %v164
    %v550 = vunpack.c.h.b16 %v164
    %v551 = vunpack.c.l.b16 %v165
    %v552 = vunpack.c.h.b16 %v165
    %v553 = vunpack.c.l.b16 %v166
    %v554 = vunpack.c.h.b16 %v166
    %v555 = vunpack.c.l.b16 %v167
    %v556 = vunpack.c.h.b16 %v167
    %v557 = vunpack.c.l.b16 %v168
    %v558 = vunpack.c.h.b16 %v168
    %v559 = vunpack.c.l.b16 %v169
    %v560 = vunpack.c.h.b16 %v169
    %v561 = vunpack.c.l.b16 %v170
    %v562 = vunpack.c.h.b16 %v170
    %v563 = vunpack.c.l.b16 %v171
    %v564 = vunpack.c.h.b16 %v171
    %v565 = vunpack.c.l.b16 %v172
    %v566 = vunpack.c.h.b16 %v172
    %v567 = vunpack.c.l.b16 %v173
    %v568 = vunpack.c.h.b16 %v173
    %v569 = vunpack.c.l.b16 %v174
    %v570 = vunpack.c.h.b16 %v174
    %v571 = vunpack.c.l.b16 %v175
    %v572 = vunpack.c.h.b16 %v175
    %v573 = vunpack.c.l.b16 %v176
    %v574 = vunpack.c.h.b16 %v176
    %v575 = vunpack.c.l.b16 %v177
    %v576 = vunpack.c.h.b16 %v177
    %v577 = vunpack.c.l.b16 %v178
    %v578 = vunpack.c.h.b16 %v178
    %v579 = vunpack.c.l.b16 %v179
    %v580 = vunpack.c.h.b16 %v179
    %v581 = vunpack.c.l.b16 %v180
    %v582 = vunpack.c.h.b16 %v180
    %v583 = vunpack.c.l.b16 %v181
    %v584 = vunpack.c.h.b16 %v181
    %v585 = vunpack.c.l.b16 %v182
    %v586 = vunpack.c.h.b16 %v182
    %v587 = vunpack.c.l.b16 %v183
    %v588 = vunpack.c.h.b16 %v183
    %v589 = vunpack.c.l.b16 %v184
    %v590 = vunpack.c.h.b16 %v184
    %v591 = vunpack.c.l.b16 %v185
    %v592 = vunpack.c.h.b16 %v185
    %v593 = vunpack.c.l.b16 %v186
    %v594 = vunpack.c.h.b16 %v186
    %v595 = vunpack.c.l.b16 %v187
    %v596 = vunpack.c.h.b16 %v187
    %v597 = vunpack.c.l.b16 %v188
    %v598 = vunpack.c.h.b16 %v188
    %v599 = vunpack.c.l.b16 %v189
    %v600 = vunpack.c.h.b16 %v189
    %v601 = vunpack.c.l.b16 %v190
    %v602 = vunpack.c.h.b16 %v190
    %v603 = vunpack.c.l.b16 %v191
    %v604 = vunpack.c.h.b16 %v191
    %v605 = vunpack.c.l.b16 %v192
    %v606 = vunpack.c.h.b16 %v192
    %v607 = vunpack.c.l.b16 %v193
    %v608 = vunpack.c.h.b16 %v193
    %v609 = vunpack.c.l.b16 %v194
    %v610 = vunpack.c.h.b16 %v194
    %v611 = vunpack.c.l.b16 %v195
    %v612 = vunpack.c.h.b16 %v195
    %v613 = vunpack.c.l.b16 %v196
    %v614 = vunpack.c.h.b16 %v196
    %v615 = vunpack.c.l.b16 %v197
    %v616 = vunpack.c.h.b16 %v197
    %v617 = vunpack.c.l.b16 %v198
    %v618 = vunpack.c.h.b16 %v198
    %v619 = vunpack.c.l.b16 %v199
    %v620 = vunpack.c.h.b16 %v199
    %v621 = vunpack.c.l.b16 %v200
    %v622 = vunpack.c.h.b16 %v200
    %v623 = vunpack.c.l.b16 %v201
    %v624 = vunpack.c.h.b16 %v201
    %v625 = vunpack.c.l.b16 %v202
    %v626 = vunpack.c.h.b16 %v202
    %v627 = vunpack.c.l.b16 %v203
    %v628 = vunpack.c.h.b16 %v203
    %v629 = vunpack.c.l.b16 %v204
    %v630 = vunpack.c.h.b16 %v204
    %v631 = vunpack.c.l.b16 %v205
    %v632 = vunpack.c.h.b16 %v205
    %v633 = vunpack.c.l.b16 %v206
    %v634 = vunpack.c.h.b16 %v206
    %v635 = vunpack.c.l.b16 %v207
    %v636 = vunpack.c.h.b16 %v207
    %v637 = vunpack.c.l.b16 %v208
    %v638 = vunpack.c.h.b16 %v208
    %v639 = vunpack.c.l.b16 %v209
    %v640 = vunpack.c.h.b16 %v209
    %v641 = vunpack.c.l.b16 %v210
    %v642 = vunpack.c.h.b16 %v210
    %v643 = vunpack.c.l.b16 %v211
    %v644 = vunpack.c.h.b16 %v211
    %v645 = vunpack.c.l.b16 %v212
    %v646 = vunpack.c.h.b16 %v212
    %v647 = vunpack.c.l.b16 %v213
    %v648 = vunpack.c.h.b16 %v213
    %v649 = vunpack.c.l.b16 %v214
    %v650 = vunpack.c.h.b16 %v214
    %v651 = vpack.c.b16 %v403, %v395
    %v652 = vpack.c.b16 %v404, %v396
    %v653 = vpack.c.b16 %v405, %v397
    %v654 = vpack.c.b16 %v406, %v398
    %v655 = vpack.c.b16 %v407, %v399
    %v656 = vpack.c.b16 %v408, %v400
    %v657 = vpack.c.b16 %v409, %v401
    %v658 = vpack.c.b16 %v410, %v402
    %v659 = vpack.c.b16 %v419, %v411
    %v660 = vpack.c.b16 %v420, %v412
    %v661 = vpack.c.b16 %v421, %v413
    %v662 = vpack.c.b16 %v422, %v414
    %v663 = vpack.c.b16 %v423, %v415
    %v664 = vpack.c.b16 %v424, %v416
    %v665 = vpack.c.b16 %v425, %v417
    %v666 = vpack.c.b16 %v426, %v418
    %v667 = vpack.c.b16 %v435, %v427
    %v668 = vpack.c.b16 %v436, %v428
    %v669 = vpack.c.b16 %v437, %v429
    %v670 = vpack.c.b16 %v438, %v430
    %v671 = vpack.c.b16 %v439, %v431
    %v672 = vpack.c.b16 %v440, %v432
    %v673 = vpack.c.b16 %v441, %v433
    %v674 = vpack.c.b16 %v442, %v434
    %v675 = vpack.c.b16 %v451, %v443
    %v676 = vpack.c.b16 %v452, %v444
    %v677 = vpack.c.b16 %v453, %v445
    %v678 = vpack.c.b16 %v454, %v446
    %v679 = vpack.c.b16 %v455, %v447
    %v680 = vpack.c.b16 %v456, %v448
    %v681 = vpack.c.b16 %v457, %v449
    %v682 = vpack.c.b16 %v458, %v450
    %v683 = vpack.c.b16 %v467, %v459
    %v684 = vpack.c.b16 %v468, %v460
    %v685 = vpack.c.b16 %v469, %v461
    %v686 = vpack.c.b16 %v470, %v462
    %v687 = vpack.c.b16 %v471, %v463
    %v688 = vpack.c.b16 %v472, %v464
    %v689 = vpack.c.b16 %v473, %v465
    %v690 = vpack.c.b16 %v474, %v466
    %v691 = vpack.c.b16 %v483, %v475
    %v692 = vpack.c.b16 %v484, %v476
    %v693 = vpack.c.b16 %v485, %v477
    %v694 = vpack.c.b16 %v486, %v478
    %v695 = vpack.c.b16 %v487, %v479
    %v696 = vpack.c.b16 %v488, %v480
    %v697 = vpack.c.b16 %v489, %v481
    %v698 = vpack.c.b16 %v490, %v482
    %v699 = vpack.c.b16 %v499, %v491
    %v700 = vpack.c.b16 %v500, %v492
    %v701 = vpack.c.b16 %v501, %v493
    %v702 = vpack.c.b16 %v502, %v494
    %v703 = vpack.c.b16 %v503, %v495
    %v704 = vpack.c.b16 %v504, %v496
    %v705 = vpack.c.b16 %v505, %v497
    %v706 = vpack.c.b16 %v506, %v498
    %v707 = vpack.c.b16 %v515, %v507
    %v708 = vpack.c.b16 %v516, %v508
    %v709 = vpack.c.b16 %v517, %v509
    %v710 = vpack.c.b16 %v518, %v510
    %v711 = vpack.c.b16 %v519, %v511
    %v712 = vpack.c.b16 %v520, %v512
    %v713 = vpack.c.b16 %v521, %v513
    %v714 = vpack.c.b16 %v522, %v514
    %v715 = vpack.c.b16 %v531, %v523
    %v716 = vpack.c.b16 %v532, %v524
    %v717 = vpack.c.b16 %v533, %v525
    %v718 = vpack.c.b16 %v534, %v526
    %v719 = vpack.c.b16 %v535, %v527
    %v720 = vpack.c.b16 %v536, %v528
    %v721 = vpack.c.b16 %v537, %v529
    %v722 = vpack.c.b16 %v538, %v530
    %v723 = vpack.c.b16 %v547, %v539
    %v724 = vpack.c.b16 %v548, %v540
    %v725 = vpack.c.b16 %v549, %v541
    %v726 = vpack.c.b16 %v550, %v542
    %v727 = vpack.c.b16 %v551, %v543
    %v728 = vpack.c.b16 %v552, %v544
    %v729 = vpack.c.b16 %v553, %v545
    %v730 = vpack.c.b16 %v554, %v546
    %v731 = vpack.c.b16 %v563, %v555
    %v732 = vpack.c.b16 %v564, %v556
    %v733 = vpack.c.b16 %v565, %v557
    %v734 = vpack.c.b16 %v566, %v558
    %v735 = vpack.c.b16 %v567, %v559
    %v736 = vpack.c.b16 %v568, %v560
    %v737 = vpack.c.b16 %v569, %v561
    %v738 = vpack.c.b16 %v570, %v562
    %v739 = vpack.c.b16 %v579, %v571
    %v740 = vpack.c.b16 %v580, %v572
    %v741 = vpack.c.b16 %v581, %v573
    %v742 = vpack.c.b16 %v582, %v574
    %v743 = vpack.c.b16 %v583, %v575
    %v744 = vpack.c.b16 %v584, %v576
    %v745 = vpack.c.b16 %v585, %v577
    %v746 = vpack.c.b16 %v586, %v578
    %v747 = vpack.c.b16 %v595, %v587
    %v748 = vpack.c.b16 %v596, %v588
    %v749 = vpack.c.b16 %v597, %v589
    %v750 = vpack.c.b16 %v598, %v590
    %v751 = vpack.c.b16 %v599, %v591
    %v752 = vpack.c.b16 %v600, %v592
    %v753 = vpack.c.b16 %v601, %v593
    %v754 = vpack.c.b16 %v602, %v594
    %v755 = vpack.c.b16 %v611, %v603
    %v756 = vpack.c.b16 %v612, %v604
    %v757 = vpack.c.b16 %v613, %v605
    %v758 = vpack.c.b16 %v614, %v606
    %v759 = vpack.c.b16 %v615, %v607
    %v760 = vpack.c.b16 %v616, %v608
    %v761 = vpack.c.b16 %v617, %v609
    %v762 = vpack.c.b16 %v618, %v610
    %v763 = vpack.c.b16 %v627, %v619
    %v764 = vpack.c.b16 %v628, %v620
    %v765 = vpack.c.b16 %v629, %v621
    %v766 = vpack.c.b16 %v630, %v622
    %v767 = vpack.c.b16 %v631, %v623
    %v768 = vpack.c.b16 %v632, %v624
    %v769 = vpack.c.b16 %v633, %v625
    %v770 = vpack.c.b16 %v634, %v626
    %v771 = vpack.c.b16 %v643, %v635
    %v772 = vpack.c.b16 %v644, %v636
    %v773 = vpack.c.b16 %v645, %v637
    %v774 = vpack.c.b16 %v646, %v638
    %v775 = vpack.c.b16 %v647, %v639
    %v776 = vpack.c.b16 %v648, %v640
    %v777 = vpack.c.b16 %v649, %v641
    %v778 = vpack.c.b16 %v650, %v642
    %907 = vmatprep.subr.bf16.mxu0 %v652
    %908 = vmatpush1.bf16.msra.mxu0 %v651
    %909 = vmatprep.subr.bf16.mxu0 %v660
    %910 = vmatpush1.bf16.msra.mxu0 %v659
    %911 = vmatprep.subr.bf16.mxu0 %v668
    %912 = vmatpush1.bf16.msra.mxu0 %v667
    %913 = vmatprep.subr.bf16.mxu0 %v676
    %914 = vmatpush1.bf16.msra.mxu0 %v675
    %915 = vmatprep.subr.bf16.mxu0 %v684
    %916 = vmatpush1.bf16.msra.mxu0 %v683
    %917 = vmatprep.subr.bf16.mxu0 %v692
    %918 = vmatpush1.bf16.msra.mxu0 %v691
    %919 = vmatprep.subr.bf16.mxu0 %v700
    %920 = vmatpush1.bf16.msra.mxu0 %v699
    %921 = vmatprep.subr.bf16.mxu0 %v708
    %922 = vmatpush1.bf16.msra.mxu0 %v707
    %923 = vmatprep.subr.bf16.mxu0 %v716
    %924 = vmatpush1.bf16.msra.mxu0 %v715
    %925 = vmatprep.subr.bf16.mxu0 %v724
    %926 = vmatpush1.bf16.msra.mxu0 %v723
    %927 = vmatprep.subr.bf16.mxu0 %v732
    %928 = vmatpush1.bf16.msra.mxu0 %v731
    %929 = vmatprep.subr.bf16.mxu0 %v740
    %930 = vmatpush1.bf16.msra.mxu0 %v739
    %931 = vmatprep.subr.bf16.mxu0 %v748
    %932 = vmatpush1.bf16.msra.mxu0 %v747
    %933 = vmatprep.subr.bf16.mxu0 %v756
    %934 = vmatpush1.bf16.msra.mxu0 %v755
    %935 = vmatprep.subr.bf16.mxu0 %v764
    %936 = vmatpush1.bf16.msra.mxu0 %v763
    %937 = vmatprep.subr.bf16.mxu0 %v772
    %938 = vmatpush1.bf16.msra.mxu0 %v771
    %939 = vmatprep.mubr.bf16.mxu0 %v264
    %940 = vmatmul.mubr.bf16.gmra.mrb[0].mxu0 %v263
    %v941 = vpop.f32.mrb[0].mxu0
    %v942 = vadd.f32 %v220, %v941
    %v943 = vpop.f32.mrb[0].mxu0
    %v944 = vadd.f32 %v224, %v943
    %v945 = vpop.f32.mrb[0].mxu0
    %v946 = vadd.f32 %v220, %v945
    %v947 = vpop.f32.mrb[0].mxu0
    %v948 = vadd.f32 %v224, %v947
    %949 = vdwg.mxu0
    %950 = vmatprep.subr.bf16.mxu0 %v654
    %951 = vmatpush1.bf16.msra.mxu0 %v653
    %952 = vmatprep.subr.bf16.mxu0 %v662
    %953 = vmatpush1.bf16.msra.mxu0 %v661
    %954 = vmatprep.subr.bf16.mxu0 %v670
    %955 = vmatpush1.bf16.msra.mxu0 %v669
    %956 = vmatprep.subr.bf16.mxu0 %v678
    %957 = vmatpush1.bf16.msra.mxu0 %v677
    %958 = vmatprep.subr.bf16.mxu0 %v686
    %959 = vmatpush1.bf16.msra.mxu0 %v685
    %960 = vmatprep.subr.bf16.mxu0 %v694
    %961 = vmatpush1.bf16.msra.mxu0 %v693
    %962 = vmatprep.subr.bf16.mxu0 %v702
    %963 = vmatpush1.bf16.msra.mxu0 %v701
    %964 = vmatprep.subr.bf16.mxu0 %v710
    %965 = vmatpush1.bf16.msra.mxu0 %v709
    %966 = vmatprep.subr.bf16.mxu0 %v718
    %967 = vmatpush1.bf16.msra.mxu0 %v717
    %968 = vmatprep.subr.bf16.mxu0 %v726
    %969 = vmatpush1.bf16.msra.mxu0 %v725
    %970 = vmatprep.subr.bf16.mxu0 %v734
    %971 = vmatpush1.bf16.msra.mxu0 %v733
    %972 = vmatprep.subr.bf16.mxu0 %v742
    %973 = vmatpush1.bf16.msra.mxu0 %v741
    %974 = vmatprep.subr.bf16.mxu0 %v750
    %975 = vmatpush1.bf16.msra.mxu0 %v749
    %976 = vmatprep.subr.bf16.mxu0 %v758
    %977 = vmatpush1.bf16.msra.mxu0 %v757
    %978 = vmatprep.subr.bf16.mxu0 %v766
    %979 = vmatpush1.bf16.msra.mxu0 %v765
    %980 = vmatprep.subr.bf16.mxu0 %v774
    %981 = vmatpush1.bf16.msra.mxu0 %v773
    %982 = vmatprep.mubr.bf16.mxu0 %v264
    %983 = vmatmul.mubr.bf16.gmra.mrb[0].mxu0 %v263
    %v984 = vpop.f32.mrb[0].mxu0
    %v985 = vadd.f32 %v228, %v984
    %v986 = vpop.f32.mrb[0].mxu0
    %v987 = vadd.f32 %v232, %v986
    %v988 = vpop.f32.mrb[0].mxu0
    %v989 = vadd.f32 %v228, %v988
    %v990 = vpop.f32.mrb[0].mxu0
    %v991 = vadd.f32 %v232, %v990
    %992 = vdwg.mxu0
    %993 = vmatprep.subr.bf16.mxu0 %v656
    %994 = vmatpush1.bf16.msra.mxu0 %v655
    %995 = vmatprep.subr.bf16.mxu0 %v664
    %996 = vmatpush1.bf16.msra.mxu0 %v663
    %997 = vmatprep.subr.bf16.mxu0 %v672
    %998 = vmatpush1.bf16.msra.mxu0 %v671
    %999 = vmatprep.subr.bf16.mxu0 %v680
    %1000 = vmatpush1.bf16.msra.mxu0 %v679
    %1001 = vmatprep.subr.bf16.mxu0 %v688
    %1002 = vmatpush1.bf16.msra.mxu0 %v687
    %1003 = vmatprep.subr.bf16.mxu0 %v696
    %1004 = vmatpush1.bf16.msra.mxu0 %v695
    %1005 = vmatprep.subr.bf16.mxu0 %v704
    %1006 = vmatpush1.bf16.msra.mxu0 %v703
    %1007 = vmatprep.subr.bf16.mxu0 %v712
    %1008 = vmatpush1.bf16.msra.mxu0 %v711
    %1009 = vmatprep.subr.bf16.mxu0 %v720
    %1010 = vmatpush1.bf16.msra.mxu0 %v719
    %1011 = vmatprep.subr.bf16.mxu0 %v728
    %1012 = vmatpush1.bf16.msra.mxu0 %v727
    %1013 = vmatprep.subr.bf16.mxu0 %v736
    %1014 = vmatpush1.bf16.msra.mxu0 %v735
    %1015 = vmatprep.subr.bf16.mxu0 %v744
    %1016 = vmatpush1.bf16.msra.mxu0 %v743
    %1017 = vmatprep.subr.bf16.mxu0 %v752
    %1018 = vmatpush1.bf16.msra.mxu0 %v751
    %1019 = vmatprep.subr.bf16.mxu0 %v760
    %1020 = vmatpush1.bf16.msra.mxu0 %v759
    %1021 = vmatprep.subr.bf16.mxu0 %v768
    %1022 = vmatpush1.bf16.msra.mxu0 %v767
    %1023 = vmatprep.subr.bf16.mxu0 %v776
    %1024 = vmatpush1.bf16.msra.mxu0 %v775
    %1025 = vmatprep.mubr.bf16.mxu0 %v264
    %1026 = vmatmul.mubr.bf16.gmra.mrb[0].mxu0 %v263
    %v1027 = vpop.f32.mrb[0].mxu0
    %v1028 = vadd.f32 %v236, %v1027
    %v1029 = vpop.f32.mrb[0].mxu0
    %v1030 = vadd.f32 %v240, %v1029
    %v1031 = vpop.f32.mrb[0].mxu0
    %v1032 = vadd.f32 %v236, %v1031
    %v1033 = vpop.f32.mrb[0].mxu0
    %v1034 = vadd.f32 %v240, %v1033
    %1035 = vdwg.mxu0
    %1036 = vmatprep.subr.bf16.mxu0 %v658
    %1037 = vmatpush1.bf16.msra.mxu0 %v657
    %1038 = vmatprep.subr.bf16.mxu0 %v666
    %1039 = vmatpush1.bf16.msra.mxu0 %v665
    %1040 = vmatprep.subr.bf16.mxu0 %v674
    %1041 = vmatpush1.bf16.msra.mxu0 %v673
    %1042 = vmatprep.subr.bf16.mxu0 %v682
    %1043 = vmatpush1.bf16.msra.mxu0 %v681
    %1044 = vmatprep.subr.bf16.mxu0 %v690
    %1045 = vmatpush1.bf16.msra.mxu0 %v689
    %1046 = vmatprep.subr.bf16.mxu0 %v698
    %1047 = vmatpush1.bf16.msra.mxu0 %v697
    %1048 = vmatprep.subr.bf16.mxu0 %v706
    %1049 = vmatpush1.bf16.msra.mxu0 %v705
    %1050 = vmatprep.subr.bf16.mxu0 %v714
    %1051 = vmatpush1.bf16.msra.mxu0 %v713
    %1052 = vmatprep.subr.bf16.mxu0 %v722
    %1053 = vmatpush1.bf16.msra.mxu0 %v721
    %1054 = vmatprep.subr.bf16.mxu0 %v730
    %1055 = vmatpush1.bf16.msra.mxu0 %v729
    %1056 = vmatprep.subr.bf16.mxu0 %v738
    %1057 = vmatpush1.bf16.msra.mxu0 %v737
    %1058 = vmatprep.subr.bf16.mxu0 %v746
    %1059 = vmatpush1.bf16.msra.mxu0 %v745
    %1060 = vmatprep.subr.bf16.mxu0 %v754
    %1061 = vmatpush1.bf16.msra.mxu0 %v753
    %1062 = vmatprep.subr.bf16.mxu0 %v762
    %1063 = vmatpush1.bf16.msra.mxu0 %v761
    %1064 = vmatprep.subr.bf16.mxu0 %v770
    %1065 = vmatpush1.bf16.msra.mxu0 %v769
    %1066 = vmatprep.subr.bf16.mxu0 %v778
    %1067 = vmatpush1.bf16.msra.mxu0 %v777
    %1068 = vmatprep.mubr.bf16.mxu0 %v264
    %1069 = vmatmul.mubr.bf16.gmra.mrb[0].mxu0 %v263
    %v1070 = vpop.f32.mrb[0].mxu0
    %v1071 = vadd.f32 %v244, %v1070
    %v1072 = vpop.f32.mrb[0].mxu0
    %v1073 = vadd.f32 %v248, %v1072
    %v1074 = vpop.f32.mrb[0].mxu0
    %v1075 = vadd.f32 %v244, %v1074
    %v1076 = vpop.f32.mrb[0].mxu0
    %v1077 = vadd.f32 %v248, %v1076
    %1078 = vdwg.mxu0
    %v1079 = vmax.f32 %v942, 0.0
    %v1080 = vmax.f32 %v944, 0.0
    %v1081 = vmax.f32 %v985, 0.0
    %v1082 = vmax.f32 %v987, 0.0
    %v1083 = vmax.f32 %v1028, 0.0
    %v1084 = vmax.f32 %v1030, 0.0
    %v1085 = vmax.f32 %v1071, 0.0
    %v1086 = vmax.f32 %v1073, 0.0
    %v1087 = vmax.f32 %v946, 0.0
    %v1088 = vmax.f32 %v948, 0.0
    %v1089 = vmax.f32 %v989, 0.0
    %v1090 = vmax.f32 %v991, 0.0
    %v1091 = vmax.f32 %v1032, 0.0
    %v1092 = vmax.f32 %v1034, 0.0
    %v1093 = vmax.f32 %v1075, 0.0
    %v1094 = vmax.f32 %v1077, 0.0
    %v1095 = vpack.c.bf16 %v1087, %v1079
    %v1096 = vpack.c.bf16 %v1088, %v1080
    %v1097 = vpack.c.bf16 %v1089, %v1081
    %v1098 = vpack.c.bf16 %v1090, %v1082
    %v1099 = vpack.c.bf16 %v1091, %v1083
    %v1100 = vpack.c.bf16 %v1092, %v1084
    %v1101 = vpack.c.bf16 %v1093, %v1085
    %v1102 = vpack.c.bf16 %v1094, %v1086
    %v1103 = vld [vmem:[#allocation8] sm:$0xff]
    %v1104 = vld [vmem:[#allocation8 + $0x8] sm:$0xff]
    %v1105 = vld [vmem:[#allocation8 + $0x10] sm:$0xff]
    %v1106 = vld [vmem:[#allocation8 + $0x18] sm:$0xff]
    %v1107 = vld [vmem:[#allocation8 + $0x20] sm:$0xff]
    %v1108 = vld [vmem:[#allocation8 + $0x28] sm:$0xff]
    %v1109 = vld [vmem:[#allocation8 + $0x30] sm:$0xff]
    %v1110 = vld [vmem:[#allocation8 + $0x38] sm:$0xff]
    %v1111 = vld [vmem:[#allocation8 + $0x40] sm:$0xff]
    %v1112 = vld [vmem:[#allocation8 + $0x48] sm:$0xff]
    %v1113 = vld [vmem:[#allocation8 + $0x50] sm:$0xff]
    %v1114 = vld [vmem:[#allocation8 + $0x58] sm:$0xff]
    %v1115 = vld [vmem:[#allocation8 + $0x60] sm:$0xff]
    %v1116 = vld [vmem:[#allocation8 + $0x68] sm:$0xff]
    %v1117 = vld [vmem:[#allocation8 + $0x70] sm:$0xff]
    %v1118 = vld [vmem:[#allocation8 + $0x78] sm:$0xff]
    %v1119 = vld [vmem:[#allocation8 + $0x80] sm:$0xff]
    %v1120 = vld [vmem:[#allocation8 + $0x88] sm:$0xff]
    %v1121 = vld [vmem:[#allocation8 + $0x90] sm:$0xff]
    %v1122 = vld [vmem:[#allocation8 + $0x98] sm:$0xff]
    %v1123 = vld [vmem:[#allocation8 + $0xa0] sm:$0xff]
    %v1124 = vld [vmem:[#allocation8 + $0xa8] sm:$0xff]
    %v1125 = vld [vmem:[#allocation8 + $0xb0] sm:$0xff]
    %v1126 = vld [vmem:[#allocation8 + $0xb8] sm:$0xff]
    %v1127 = vld [vmem:[#allocation8 + $0xc0] sm:$0xff]
    %v1128 = vld [vmem:[#allocation8 + $0xc8] sm:$0xff]
    %v1129 = vld [vmem:[#allocation8 + $0xd0] sm:$0xff]
    %v1130 = vld [vmem:[#allocation8 + $0xd8] sm:$0xff]
    %v1131 = vld [vmem:[#allocation8 + $0xe0] sm:$0xff]
    %v1132 = vld [vmem:[#allocation8 + $0xe8] sm:$0xff]
    %v1133 = vld [vmem:[#allocation8 + $0xf0] sm:$0xff]
    %v1134 = vld [vmem:[#allocation8 + $0xf8] sm:$0xff]
    %v1135 = vld [vmem:[#allocation8 + $0x100] sm:$0xff]
    %v1136 = vld [vmem:[#allocation8 + $0x108] sm:$0xff]
    %v1137 = vld [vmem:[#allocation8 + $0x110] sm:$0xff]
    %v1138 = vld [vmem:[#allocation8 + $0x118] sm:$0xff]
    %v1139 = vld [vmem:[#allocation8 + $0x120] sm:$0xff]
    %v1140 = vld [vmem:[#allocation8 + $0x128] sm:$0xff]
    %v1141 = vld [vmem:[#allocation8 + $0x130] sm:$0xff]
    %v1142 = vld [vmem:[#allocation8 + $0x138] sm:$0xff]
    %v1143 = vld [vmem:[#allocation8 + $0x140] sm:$0xff]
    %v1144 = vld [vmem:[#allocation8 + $0x148] sm:$0xff]
    %v1145 = vld [vmem:[#allocation8 + $0x150] sm:$0xff]
    %v1146 = vld [vmem:[#allocation8 + $0x158] sm:$0xff]
    %v1147 = vld [vmem:[#allocation8 + $0x160] sm:$0xff]
    %v1148 = vld [vmem:[#allocation8 + $0x168] sm:$0xff]
    %v1149 = vld [vmem:[#allocation8 + $0x170] sm:$0xff]
    %v1150 = vld [vmem:[#allocation8 + $0x178] sm:$0xff]
    %v1151 = vld [vmem:[#allocation8 + $0x180] sm:$0xff]
    %v1152 = vld [vmem:[#allocation8 + $0x188] sm:$0xff]
    %v1153 = vld [vmem:[#allocation8 + $0x190] sm:$0xff]
    %v1154 = vld [vmem:[#allocation8 + $0x198] sm:$0xff]
    %v1155 = vld [vmem:[#allocation8 + $0x1a0] sm:$0xff]
    %v1156 = vld [vmem:[#allocation8 + $0x1a8] sm:$0xff]
    %v1157 = vld [vmem:[#allocation8 + $0x1b0] sm:$0xff]
    %v1158 = vld [vmem:[#allocation8 + $0x1b8] sm:$0xff]
    %v1159 = vld [vmem:[#allocation8 + $0x1c0] sm:$0xff]
    %v1160 = vld [vmem:[#allocation8 + $0x1c8] sm:$0xff]
    %v1161 = vld [vmem:[#allocation8 + $0x1d0] sm:$0xff]
    %v1162 = vld [vmem:[#allocation8 + $0x1d8] sm:$0xff]
    %v1163 = vld [vmem:[#allocation8 + $0x1e0] sm:$0xff]
    %v1164 = vld [vmem:[#allocation8 + $0x1e8] sm:$0xff]
    %v1165 = vld [vmem:[#allocation8 + $0x1f0] sm:$0xff]
    %v1166 = vld [vmem:[#allocation8 + $0x1f8] sm:$0xff]
    %v1167 = vld [vmem:[#allocation8 + $0x200] sm:$0xff]
    %v1168 = vld [vmem:[#allocation8 + $0x208] sm:$0xff]
    %v1169 = vld [vmem:[#allocation8 + $0x210] sm:$0xff]
    %v1170 = vld [vmem:[#allocation8 + $0x218] sm:$0xff]
    %v1171 = vld [vmem:[#allocation8 + $0x220] sm:$0xff]
    %v1172 = vld [vmem:[#allocation8 + $0x228] sm:$0xff]
    %v1173 = vld [vmem:[#allocation8 + $0x230] sm:$0xff]
    %v1174 = vld [vmem:[#allocation8 + $0x238] sm:$0xff]
    %v1175 = vld [vmem:[#allocation8 + $0x240] sm:$0xff]
    %v1176 = vld [vmem:[#allocation8 + $0x248] sm:$0xff]
    %v1177 = vld [vmem:[#allocation8 + $0x250] sm:$0xff]
    %v1178 = vld [vmem:[#allocation8 + $0x258] sm:$0xff]
    %v1179 = vld [vmem:[#allocation8 + $0x260] sm:$0xff]
    %v1180 = vld [vmem:[#allocation8 + $0x268] sm:$0xff]
    %v1181 = vld [vmem:[#allocation8 + $0x270] sm:$0xff]
    %v1182 = vld [vmem:[#allocation8 + $0x278] sm:$0xff]
    %v1183 = vld [vmem:[#allocation8 + $0x280] sm:$0xff]
    %v1184 = vld [vmem:[#allocation8 + $0x288] sm:$0xff]
    %v1185 = vld [vmem:[#allocation8 + $0x290] sm:$0xff]
    %v1186 = vld [vmem:[#allocation8 + $0x298] sm:$0xff]
    %v1187 = vld [vmem:[#allocation8 + $0x2a0] sm:$0xff]
    %v1188 = vld [vmem:[#allocation8 + $0x2a8] sm:$0xff]
    %v1189 = vld [vmem:[#allocation8 + $0x2b0] sm:$0xff]
    %v1190 = vld [vmem:[#allocation8 + $0x2b8] sm:$0xff]
    %v1191 = vld [vmem:[#allocation8 + $0x2c0] sm:$0xff]
    %v1192 = vld [vmem:[#allocation8 + $0x2c8] sm:$0xff]
    %v1193 = vld [vmem:[#allocation8 + $0x2d0] sm:$0xff]
    %v1194 = vld [vmem:[#allocation8 + $0x2d8] sm:$0xff]
    %v1195 = vld [vmem:[#allocation8 + $0x2e0] sm:$0xff]
    %v1196 = vld [vmem:[#allocation8 + $0x2e8] sm:$0xff]
    %v1197 = vld [vmem:[#allocation8 + $0x2f0] sm:$0xff]
    %v1198 = vld [vmem:[#allocation8 + $0x2f8] sm:$0xff]
    %v1199 = vld [vmem:[#allocation8 + $0x300] sm:$0xff]
    %v1200 = vld [vmem:[#allocation8 + $0x308] sm:$0xff]
    %v1201 = vld [vmem:[#allocation8 + $0x310] sm:$0xff]
    %v1202 = vld [vmem:[#allocation8 + $0x318] sm:$0xff]
    %v1203 = vld [vmem:[#allocation8 + $0x320] sm:$0xff]
    %v1204 = vld [vmem:[#allocation8 + $0x328] sm:$0xff]
    %v1205 = vld [vmem:[#allocation8 + $0x330] sm:$0xff]
    %v1206 = vld [vmem:[#allocation8 + $0x338] sm:$0xff]
    %v1207 = vld [vmem:[#allocation8 + $0x340] sm:$0xff]
    %v1208 = vld [vmem:[#allocation8 + $0x348] sm:$0xff]
    %v1209 = vld [vmem:[#allocation8 + $0x350] sm:$0xff]
    %v1210 = vld [vmem:[#allocation8 + $0x358] sm:$0xff]
    %v1211 = vld [vmem:[#allocation8 + $0x360] sm:$0xff]
    %v1212 = vld [vmem:[#allocation8 + $0x368] sm:$0xff]
    %v1213 = vld [vmem:[#allocation8 + $0x370] sm:$0xff]
    %v1214 = vld [vmem:[#allocation8 + $0x378] sm:$0xff]
    %v1215 = vld [vmem:[#allocation8 + $0x380] sm:$0xff]
    %v1216 = vld [vmem:[#allocation8 + $0x388] sm:$0xff]
    %v1217 = vld [vmem:[#allocation8 + $0x390] sm:$0xff]
    %v1218 = vld [vmem:[#allocation8 + $0x398] sm:$0xff]
    %v1219 = vld [vmem:[#allocation8 + $0x3a0] sm:$0xff]
    %v1220 = vld [vmem:[#allocation8 + $0x3a8] sm:$0xff]
    %v1221 = vld [vmem:[#allocation8 + $0x3b0] sm:$0xff]
    %v1222 = vld [vmem:[#allocation8 + $0x3b8] sm:$0xff]
    %v1223 = vld [vmem:[#allocation8 + $0x3c0] sm:$0xff]
    %v1224 = vld [vmem:[#allocation8 + $0x3c8] sm:$0xff]
    %v1225 = vld [vmem:[#allocation8 + $0x3d0] sm:$0xff]
    %v1226 = vld [vmem:[#allocation8 + $0x3d8] sm:$0xff]
    %v1227 = vld [vmem:[#allocation8 + $0x3e0] sm:$0xff]
    %v1228 = vld [vmem:[#allocation8 + $0x3e8] sm:$0xff]
    %v1229 = vld [vmem:[#allocation8 + $0x3f0] sm:$0xff]
    %v1230 = vld [vmem:[#allocation8 + $0x3f8] sm:$0xff]
    %v1231 = vld [vmem:[#allocation10] sm:$0x3]
    %v1233 = vlaneseq
    %v1234 = vshrl.u32 %v1233, 7
    %v1235 = vsub.s32 0, %v1234
    %v1236 = vrot.slane %v1231, %v1235
    %v1237 = vlaneseq
    %v1238 = vshrl.u32 %v1237, 7
    %v1239 = vsub.s32 1, %v1238
    %v1240 = vrot.slane %v1231, %v1239
    %v1371 = vunpack.c.l.b16 %v1103
    %v1372 = vunpack.c.h.b16 %v1103
    %v1373 = vunpack.c.l.b16 %v1104
    %v1374 = vunpack.c.h.b16 %v1104
    %v1375 = vunpack.c.l.b16 %v1105
    %v1376 = vunpack.c.h.b16 %v1105
    %v1377 = vunpack.c.l.b16 %v1106
    %v1378 = vunpack.c.h.b16 %v1106
    %v1379 = vunpack.c.l.b16 %v1107
    %v1380 = vunpack.c.h.b16 %v1107
    %v1381 = vunpack.c.l.b16 %v1108
    %v1382 = vunpack.c.h.b16 %v1108
    %v1383 = vunpack.c.l.b16 %v1109
    %v1384 = vunpack.c.h.b16 %v1109
    %v1385 = vunpack.c.l.b16 %v1110
    %v1386 = vunpack.c.h.b16 %v1110
    %v1387 = vunpack.c.l.b16 %v1111
    %v1388 = vunpack.c.h.b16 %v1111
    %v1389 = vunpack.c.l.b16 %v1112
    %v1390 = vunpack.c.h.b16 %v1112
    %v1391 = vunpack.c.l.b16 %v1113
    %v1392 = vunpack.c.h.b16 %v1113
    %v1393 = vunpack.c.l.b16 %v1114
    %v1394 = vunpack.c.h.b16 %v1114
    %v1395 = vunpack.c.l.b16 %v1115
    %v1396 = vunpack.c.h.b16 %v1115
    %v1397 = vunpack.c.l.b16 %v1116
    %v1398 = vunpack.c.h.b16 %v1116
    %v1399 = vunpack.c.l.b16 %v1117
    %v1400 = vunpack.c.h.b16 %v1117
    %v1401 = vunpack.c.l.b16 %v1118
    %v1402 = vunpack.c.h.b16 %v1118
    %v1403 = vunpack.c.l.b16 %v1119
    %v1404 = vunpack.c.h.b16 %v1119
    %v1405 = vunpack.c.l.b16 %v1120
    %v1406 = vunpack.c.h.b16 %v1120
    %v1407 = vunpack.c.l.b16 %v1121
    %v1408 = vunpack.c.h.b16 %v1121
    %v1409 = vunpack.c.l.b16 %v1122
    %v1410 = vunpack.c.h.b16 %v1122
    %v1411 = vunpack.c.l.b16 %v1123
    %v1412 = vunpack.c.h.b16 %v1123
    %v1413 = vunpack.c.l.b16 %v1124
    %v1414 = vunpack.c.h.b16 %v1124
    %v1415 = vunpack.c.l.b16 %v1125
    %v1416 = vunpack.c.h.b16 %v1125
    %v1417 = vunpack.c.l.b16 %v1126
    %v1418 = vunpack.c.h.b16 %v1126
    %v1419 = vunpack.c.l.b16 %v1127
    %v1420 = vunpack.c.h.b16 %v1127
    %v1421 = vunpack.c.l.b16 %v1128
    %v1422 = vunpack.c.h.b16 %v1128
    %v1423 = vunpack.c.l.b16 %v1129
    %v1424 = vunpack.c.h.b16 %v1129
    %v1425 = vunpack.c.l.b16 %v1130
    %v1426 = vunpack.c.h.b16 %v1130
    %v1427 = vunpack.c.l.b16 %v1131
    %v1428 = vunpack.c.h.b16 %v1131
    %v1429 = vunpack.c.l.b16 %v1132
    %v1430 = vunpack.c.h.b16 %v1132
    %v1431 = vunpack.c.l.b16 %v1133
    %v1432 = vunpack.c.h.b16 %v1133
    %v1433 = vunpack.c.l.b16 %v1134
    %v1434 = vunpack.c.h.b16 %v1134
    %v1435 = vunpack.c.l.b16 %v1135
    %v1436 = vunpack.c.h.b16 %v1135
    %v1437 = vunpack.c.l.b16 %v1136
    %v1438 = vunpack.c.h.b16 %v1136
    %v1439 = vunpack.c.l.b16 %v1137
    %v1440 = vunpack.c.h.b16 %v1137
    %v1441 = vunpack.c.l.b16 %v1138
    %v1442 = vunpack.c.h.b16 %v1138
    %v1443 = vunpack.c.l.b16 %v1139
    %v1444 = vunpack.c.h.b16 %v1139
    %v1445 = vunpack.c.l.b16 %v1140
    %v1446 = vunpack.c.h.b16 %v1140
    %v1447 = vunpack.c.l.b16 %v1141
    %v1448 = vunpack.c.h.b16 %v1141
    %v1449 = vunpack.c.l.b16 %v1142
    %v1450 = vunpack.c.h.b16 %v1142
    %v1451 = vunpack.c.l.b16 %v1143
    %v1452 = vunpack.c.h.b16 %v1143
    %v1453 = vunpack.c.l.b16 %v1144
    %v1454 = vunpack.c.h.b16 %v1144
    %v1455 = vunpack.c.l.b16 %v1145
    %v1456 = vunpack.c.h.b16 %v1145
    %v1457 = vunpack.c.l.b16 %v1146
    %v1458 = vunpack.c.h.b16 %v1146
    %v1459 = vunpack.c.l.b16 %v1147
    %v1460 = vunpack.c.h.b16 %v1147
    %v1461 = vunpack.c.l.b16 %v1148
    %v1462 = vunpack.c.h.b16 %v1148
    %v1463 = vunpack.c.l.b16 %v1149
    %v1464 = vunpack.c.h.b16 %v1149
    %v1465 = vunpack.c.l.b16 %v1150
    %v1466 = vunpack.c.h.b16 %v1150
    %v1467 = vunpack.c.l.b16 %v1151
    %v1468 = vunpack.c.h.b16 %v1151
    %v1469 = vunpack.c.l.b16 %v1152
    %v1470 = vunpack.c.h.b16 %v1152
    %v1471 = vunpack.c.l.b16 %v1153
    %v1472 = vunpack.c.h.b16 %v1153
    %v1473 = vunpack.c.l.b16 %v1154
    %v1474 = vunpack.c.h.b16 %v1154
    %v1475 = vunpack.c.l.b16 %v1155
    %v1476 = vunpack.c.h.b16 %v1155
    %v1477 = vunpack.c.l.b16 %v1156
    %v1478 = vunpack.c.h.b16 %v1156
    %v1479 = vunpack.c.l.b16 %v1157
    %v1480 = vunpack.c.h.b16 %v1157
    %v1481 = vunpack.c.l.b16 %v1158
    %v1482 = vunpack.c.h.b16 %v1158
    %v1483 = vunpack.c.l.b16 %v1159
    %v1484 = vunpack.c.h.b16 %v1159
    %v1485 = vunpack.c.l.b16 %v1160
    %v1486 = vunpack.c.h.b16 %v1160
    %v1487 = vunpack.c.l.b16 %v1161
    %v1488 = vunpack.c.h.b16 %v1161
    %v1489 = vunpack.c.l.b16 %v1162
    %v1490 = vunpack.c.h.b16 %v1162
    %v1491 = vunpack.c.l.b16 %v1163
    %v1492 = vunpack.c.h.b16 %v1163
    %v1493 = vunpack.c.l.b16 %v1164
    %v1494 = vunpack.c.h.b16 %v1164
    %v1495 = vunpack.c.l.b16 %v1165
    %v1496 = vunpack.c.h.b16 %v1165
    %v1497 = vunpack.c.l.b16 %v1166
    %v1498 = vunpack.c.h.b16 %v1166
    %v1499 = vunpack.c.l.b16 %v1167
    %v1500 = vunpack.c.h.b16 %v1167
    %v1501 = vunpack.c.l.b16 %v1168
    %v1502 = vunpack.c.h.b16 %v1168
    %v1503 = vunpack.c.l.b16 %v1169
    %v1504 = vunpack.c.h.b16 %v1169
    %v1505 = vunpack.c.l.b16 %v1170
    %v1506 = vunpack.c.h.b16 %v1170
    %v1507 = vunpack.c.l.b16 %v1171
    %v1508 = vunpack.c.h.b16 %v1171
    %v1509 = vunpack.c.l.b16 %v1172
    %v1510 = vunpack.c.h.b16 %v1172
    %v1511 = vunpack.c.l.b16 %v1173
    %v1512 = vunpack.c.h.b16 %v1173
    %v1513 = vunpack.c.l.b16 %v1174
    %v1514 = vunpack.c.h.b16 %v1174
    %v1515 = vunpack.c.l.b16 %v1175
    %v1516 = vunpack.c.h.b16 %v1175
    %v1517 = vunpack.c.l.b16 %v1176
    %v1518 = vunpack.c.h.b16 %v1176
    %v1519 = vunpack.c.l.b16 %v1177
    %v1520 = vunpack.c.h.b16 %v1177
    %v1521 = vunpack.c.l.b16 %v1178
    %v1522 = vunpack.c.h.b16 %v1178
    %v1523 = vunpack.c.l.b16 %v1179
    %v1524 = vunpack.c.h.b16 %v1179
    %v1525 = vunpack.c.l.b16 %v1180
    %v1526 = vunpack.c.h.b16 %v1180
    %v1527 = vunpack.c.l.b16 %v1181
    %v1528 = vunpack.c.h.b16 %v1181
    %v1529 = vunpack.c.l.b16 %v1182
    %v1530 = vunpack.c.h.b16 %v1182
    %v1531 = vunpack.c.l.b16 %v1183
    %v1532 = vunpack.c.h.b16 %v1183
    %v1533 = vunpack.c.l.b16 %v1184
    %v1534 = vunpack.c.h.b16 %v1184
    %v1535 = vunpack.c.l.b16 %v1185
    %v1536 = vunpack.c.h.b16 %v1185
    %v1537 = vunpack.c.l.b16 %v1186
    %v1538 = vunpack.c.h.b16 %v1186
    %v1539 = vunpack.c.l.b16 %v1187
    %v1540 = vunpack.c.h.b16 %v1187
    %v1541 = vunpack.c.l.b16 %v1188
    %v1542 = vunpack.c.h.b16 %v1188
    %v1543 = vunpack.c.l.b16 %v1189
    %v1544 = vunpack.c.h.b16 %v1189
    %v1545 = vunpack.c.l.b16 %v1190
    %v1546 = vunpack.c.h.b16 %v1190
    %v1547 = vunpack.c.l.b16 %v1191
    %v1548 = vunpack.c.h.b16 %v1191
    %v1549 = vunpack.c.l.b16 %v1192
    %v1550 = vunpack.c.h.b16 %v1192
    %v1551 = vunpack.c.l.b16 %v1193
    %v1552 = vunpack.c.h.b16 %v1193
    %v1553 = vunpack.c.l.b16 %v1194
    %v1554 = vunpack.c.h.b16 %v1194
    %v1555 = vunpack.c.l.b16 %v1195
    %v1556 = vunpack.c.h.b16 %v1195
    %v1557 = vunpack.c.l.b16 %v1196
    %v1558 = vunpack.c.h.b16 %v1196
    %v1559 = vunpack.c.l.b16 %v1197
    %v1560 = vunpack.c.h.b16 %v1197
    %v1561 = vunpack.c.l.b16 %v1198
    %v1562 = vunpack.c.h.b16 %v1198
    %v1563 = vunpack.c.l.b16 %v1199
    %v1564 = vunpack.c.h.b16 %v1199
    %v1565 = vunpack.c.l.b16 %v1200
    %v1566 = vunpack.c.h.b16 %v1200
    %v1567 = vunpack.c.l.b16 %v1201
    %v1568 = vunpack.c.h.b16 %v1201
    %v1569 = vunpack.c.l.b16 %v1202
    %v1570 = vunpack.c.h.b16 %v1202
    %v1571 = vunpack.c.l.b16 %v1203
    %v1572 = vunpack.c.h.b16 %v1203
    %v1573 = vunpack.c.l.b16 %v1204
    %v1574 = vunpack.c.h.b16 %v1204
    %v1575 = vunpack.c.l.b16 %v1205
    %v1576 = vunpack.c.h.b16 %v1205
    %v1577 = vunpack.c.l.b16 %v1206
    %v1578 = vunpack.c.h.b16 %v1206
    %v1579 = vunpack.c.l.b16 %v1207
    %v1580 = vunpack.c.h.b16 %v1207
    %v1581 = vunpack.c.l.b16 %v1208
    %v1582 = vunpack.c.h.b16 %v1208
    %v1583 = vunpack.c.l.b16 %v1209
    %v1584 = vunpack.c.h.b16 %v1209
    %v1585 = vunpack.c.l.b16 %v1210
    %v1586 = vunpack.c.h.b16 %v1210
    %v1587 = vunpack.c.l.b16 %v1211
    %v1588 = vunpack.c.h.b16 %v1211
    %v1589 = vunpack.c.l.b16 %v1212
    %v1590 = vunpack.c.h.b16 %v1212
    %v1591 = vunpack.c.l.b16 %v1213
    %v1592 = vunpack.c.h.b16 %v1213
    %v1593 = vunpack.c.l.b16 %v1214
    %v1594 = vunpack.c.h.b16 %v1214
    %v1595 = vunpack.c.l.b16 %v1215
    %v1596 = vunpack.c.h.b16 %v1215
    %v1597 = vunpack.c.l.b16 %v1216
    %v1598 = vunpack.c.h.b16 %v1216
    %v1599 = vunpack.c.l.b16 %v1217
    %v1600 = vunpack.c.h.b16 %v1217
    %v1601 = vunpack.c.l.b16 %v1218
    %v1602 = vunpack.c.h.b16 %v1218
    %v1603 = vunpack.c.l.b16 %v1219
    %v1604 = vunpack.c.h.b16 %v1219
    %v1605 = vunpack.c.l.b16 %v1220
    %v1606 = vunpack.c.h.b16 %v1220
    %v1607 = vunpack.c.l.b16 %v1221
    %v1608 = vunpack.c.h.b16 %v1221
    %v1609 = vunpack.c.l.b16 %v1222
    %v1610 = vunpack.c.h.b16 %v1222
    %v1611 = vunpack.c.l.b16 %v1223
    %v1612 = vunpack.c.h.b16 %v1223
    %v1613 = vunpack.c.l.b16 %v1224
    %v1614 = vunpack.c.h.b16 %v1224
    %v1615 = vunpack.c.l.b16 %v1225
    %v1616 = vunpack.c.h.b16 %v1225
    %v1617 = vunpack.c.l.b16 %v1226
    %v1618 = vunpack.c.h.b16 %v1226
    %v1619 = vunpack.c.l.b16 %v1227
    %v1620 = vunpack.c.h.b16 %v1227
    %v1621 = vunpack.c.l.b16 %v1228
    %v1622 = vunpack.c.h.b16 %v1228
    %v1623 = vunpack.c.l.b16 %v1229
    %v1624 = vunpack.c.h.b16 %v1229
    %v1625 = vunpack.c.l.b16 %v1230
    %v1626 = vunpack.c.h.b16 %v1230
    %v1627 = vpack.c.b16 %v1373, %v1371
    %v1628 = vpack.c.b16 %v1374, %v1372
    %v1629 = vpack.c.b16 %v1377, %v1375
    %v1630 = vpack.c.b16 %v1378, %v1376
    %v1631 = vpack.c.b16 %v1381, %v1379
    %v1632 = vpack.c.b16 %v1382, %v1380
    %v1633 = vpack.c.b16 %v1385, %v1383
    %v1634 = vpack.c.b16 %v1386, %v1384
    %v1635 = vpack.c.b16 %v1389, %v1387
    %v1636 = vpack.c.b16 %v1390, %v1388
    %v1637 = vpack.c.b16 %v1393, %v1391
    %v1638 = vpack.c.b16 %v1394, %v1392
    %v1639 = vpack.c.b16 %v1397, %v1395
    %v1640 = vpack.c.b16 %v1398, %v1396
    %v1641 = vpack.c.b16 %v1401, %v1399
    %v1642 = vpack.c.b16 %v1402, %v1400
    %v1643 = vpack.c.b16 %v1405, %v1403
    %v1644 = vpack.c.b16 %v1406, %v1404
    %v1645 = vpack.c.b16 %v1409, %v1407
    %v1646 = vpack.c.b16 %v1410, %v1408
    %v1647 = vpack.c.b16 %v1413, %v1411
    %v1648 = vpack.c.b16 %v1414, %v1412
    %v1649 = vpack.c.b16 %v1417, %v1415
    %v1650 = vpack.c.b16 %v1418, %v1416
    %v1651 = vpack.c.b16 %v1421, %v1419
    %v1652 = vpack.c.b16 %v1422, %v1420
    %v1653 = vpack.c.b16 %v1425, %v1423
    %v1654 = vpack.c.b16 %v1426, %v1424
    %v1655 = vpack.c.b16 %v1429, %v1427
    %v1656 = vpack.c.b16 %v1430, %v1428
    %v1657 = vpack.c.b16 %v1433, %v1431
    %v1658 = vpack.c.b16 %v1434, %v1432
    %v1659 = vpack.c.b16 %v1437, %v1435
    %v1660 = vpack.c.b16 %v1438, %v1436
    %v1661 = vpack.c.b16 %v1441, %v1439
    %v1662 = vpack.c.b16 %v1442, %v1440
    %v1663 = vpack.c.b16 %v1445, %v1443
    %v1664 = vpack.c.b16 %v1446, %v1444
    %v1665 = vpack.c.b16 %v1449, %v1447
    %v1666 = vpack.c.b16 %v1450, %v1448
    %v1667 = vpack.c.b16 %v1453, %v1451
    %v1668 = vpack.c.b16 %v1454, %v1452
    %v1669 = vpack.c.b16 %v1457, %v1455
    %v1670 = vpack.c.b16 %v1458, %v1456
    %v1671 = vpack.c.b16 %v1461, %v1459
    %v1672 = vpack.c.b16 %v1462, %v1460
    %v1673 = vpack.c.b16 %v1465, %v1463
    %v1674 = vpack.c.b16 %v1466, %v1464
    %v1675 = vpack.c.b16 %v1469, %v1467
    %v1676 = vpack.c.b16 %v1470, %v1468
    %v1677 = vpack.c.b16 %v1473, %v1471
    %v1678 = vpack.c.b16 %v1474, %v1472
    %v1679 = vpack.c.b16 %v1477, %v1475
    %v1680 = vpack.c.b16 %v1478, %v1476
    %v1681 = vpack.c.b16 %v1481, %v1479
    %v1682 = vpack.c.b16 %v1482, %v1480
    %v1683 = vpack.c.b16 %v1485, %v1483
    %v1684 = vpack.c.b16 %v1486, %v1484
    %v1685 = vpack.c.b16 %v1489, %v1487
    %v1686 = vpack.c.b16 %v1490, %v1488
    %v1687 = vpack.c.b16 %v1493, %v1491
    %v1688 = vpack.c.b16 %v1494, %v1492
    %v1689 = vpack.c.b16 %v1497, %v1495
    %v1690 = vpack.c.b16 %v1498, %v1496
    %v1691 = vpack.c.b16 %v1501, %v1499
    %v1692 = vpack.c.b16 %v1502, %v1500
    %v1693 = vpack.c.b16 %v1505, %v1503
    %v1694 = vpack.c.b16 %v1506, %v1504
    %v1695 = vpack.c.b16 %v1509, %v1507
    %v1696 = vpack.c.b16 %v1510, %v1508
    %v1697 = vpack.c.b16 %v1513, %v1511
    %v1698 = vpack.c.b16 %v1514, %v1512
    %v1699 = vpack.c.b16 %v1517, %v1515
    %v1700 = vpack.c.b16 %v1518, %v1516
    %v1701 = vpack.c.b16 %v1521, %v1519
    %v1702 = vpack.c.b16 %v1522, %v1520
    %v1703 = vpack.c.b16 %v1525, %v1523
    %v1704 = vpack.c.b16 %v1526, %v1524
    %v1705 = vpack.c.b16 %v1529, %v1527
    %v1706 = vpack.c.b16 %v1530, %v1528
    %v1707 = vpack.c.b16 %v1533, %v1531
    %v1708 = vpack.c.b16 %v1534, %v1532
    %v1709 = vpack.c.b16 %v1537, %v1535
    %v1710 = vpack.c.b16 %v1538, %v1536
    %v1711 = vpack.c.b16 %v1541, %v1539
    %v1712 = vpack.c.b16 %v1542, %v1540
    %v1713 = vpack.c.b16 %v1545, %v1543
    %v1714 = vpack.c.b16 %v1546, %v1544
    %v1715 = vpack.c.b16 %v1549, %v1547
    %v1716 = vpack.c.b16 %v1550, %v1548
    %v1717 = vpack.c.b16 %v1553, %v1551
    %v1718 = vpack.c.b16 %v1554, %v1552
    %v1719 = vpack.c.b16 %v1557, %v1555
    %v1720 = vpack.c.b16 %v1558, %v1556
    %v1721 = vpack.c.b16 %v1561, %v1559
    %v1722 = vpack.c.b16 %v1562, %v1560
    %v1723 = vpack.c.b16 %v1565, %v1563
    %v1724 = vpack.c.b16 %v1566, %v1564
    %v1725 = vpack.c.b16 %v1569, %v1567
    %v1726 = vpack.c.b16 %v1570, %v1568
    %v1727 = vpack.c.b16 %v1573, %v1571
    %v1728 = vpack.c.b16 %v1574, %v1572
    %v1729 = vpack.c.b16 %v1577, %v1575
    %v1730 = vpack.c.b16 %v1578, %v1576
    %v1731 = vpack.c.b16 %v1581, %v1579
    %v1732 = vpack.c.b16 %v1582, %v1580
    %v1733 = vpack.c.b16 %v1585, %v1583
    %v1734 = vpack.c.b16 %v1586, %v1584
    %v1735 = vpack.c.b16 %v1589, %v1587
    %v1736 = vpack.c.b16 %v1590, %v1588
    %v1737 = vpack.c.b16 %v1593, %v1591
    %v1738 = vpack.c.b16 %v1594, %v1592
    %v1739 = vpack.c.b16 %v1597, %v1595
    %v1740 = vpack.c.b16 %v1598, %v1596
    %v1741 = vpack.c.b16 %v1601, %v1599
    %v1742 = vpack.c.b16 %v1602, %v1600
    %v1743 = vpack.c.b16 %v1605, %v1603
    %v1744 = vpack.c.b16 %v1606, %v1604
    %v1745 = vpack.c.b16 %v1609, %v1607
    %v1746 = vpack.c.b16 %v1610, %v1608
    %v1747 = vpack.c.b16 %v1613, %v1611
    %v1748 = vpack.c.b16 %v1614, %v1612
    %v1749 = vpack.c.b16 %v1617, %v1615
    %v1750 = vpack.c.b16 %v1618, %v1616
    %v1751 = vpack.c.b16 %v1621, %v1619
    %v1752 = vpack.c.b16 %v1622, %v1620
    %v1753 = vpack.c.b16 %v1625, %v1623
    %v1754 = vpack.c.b16 %v1626, %v1624
    %1883 = vmatprep.subr.bf16.mxu0 %v1628
    %1884 = vmatpush1.bf16.msra.mxu0 %v1627
    %1885 = vmatprep.subr.bf16.mxu0 %v1630
    %1886 = vmatpush1.bf16.msra.mxu0 %v1629
    %1887 = vmatprep.subr.bf16.mxu0 %v1632
    %1888 = vmatpush1.bf16.msra.mxu0 %v1631
    %1889 = vmatprep.subr.bf16.mxu0 %v1634
    %1890 = vmatpush1.bf16.msra.mxu0 %v1633
    %1891 = vmatprep.subr.bf16.mxu0 %v1636
    %1892 = vmatpush1.bf16.msra.mxu0 %v1635
    %1893 = vmatprep.subr.bf16.mxu0 %v1638
    %1894 = vmatpush1.bf16.msra.mxu0 %v1637
    %1895 = vmatprep.subr.bf16.mxu0 %v1640
    %1896 = vmatpush1.bf16.msra.mxu0 %v1639
    %1897 = vmatprep.subr.bf16.mxu0 %v1642
    %1898 = vmatpush1.bf16.msra.mxu0 %v1641
    %1899 = vmatprep.subr.bf16.mxu0 %v1644
    %1900 = vmatpush1.bf16.msra.mxu0 %v1643
    %1901 = vmatprep.subr.bf16.mxu0 %v1646
    %1902 = vmatpush1.bf16.msra.mxu0 %v1645
    %1903 = vmatprep.subr.bf16.mxu0 %v1648
    %1904 = vmatpush1.bf16.msra.mxu0 %v1647
    %1905 = vmatprep.subr.bf16.mxu0 %v1650
    %1906 = vmatpush1.bf16.msra.mxu0 %v1649
    %1907 = vmatprep.subr.bf16.mxu0 %v1652
    %1908 = vmatpush1.bf16.msra.mxu0 %v1651
    %1909 = vmatprep.subr.bf16.mxu0 %v1654
    %1910 = vmatpush1.bf16.msra.mxu0 %v1653
    %1911 = vmatprep.subr.bf16.mxu0 %v1656
    %1912 = vmatpush1.bf16.msra.mxu0 %v1655
    %1913 = vmatprep.subr.bf16.mxu0 %v1658
    %1914 = vmatpush1.bf16.msra.mxu0 %v1657
    %1915 = vmatprep.mubr.bf16.mxu0 %v1096
    %1916 = vmatmul.mubr.bf16.gmra.mrb[0].mxu0 %v1095
    %v1917 = vpop.f32.mrb[0].mxu0
    %v1918 = vadd.f32 %v1236, %v1917
    %v1919 = vpop.f32.mrb[0].mxu0
    %v1920 = vadd.f32 %v1240, %v1919
    %v1921 = vpop.f32.mrb[0].mxu0
    %v1922 = vadd.f32 %v1236, %v1921
    %v1923 = vpop.f32.mrb[0].mxu0
    %v1924 = vadd.f32 %v1240, %v1923
    %1925 = vdwg.mxu0
    %1926 = vmatprep.subr.bf16.mxu0 %v1660
    %1927 = vmatpush1.bf16.msra.mxu0 %v1659
    %1928 = vmatprep.subr.bf16.mxu0 %v1662
    %1929 = vmatpush1.bf16.msra.mxu0 %v1661
    %1930 = vmatprep.subr.bf16.mxu0 %v1664
    %1931 = vmatpush1.bf16.msra.mxu0 %v1663
    %1932 = vmatprep.subr.bf16.mxu0 %v1666
    %1933 = vmatpush1.bf16.msra.mxu0 %v1665
    %1934 = vmatprep.subr.bf16.mxu0 %v1668
    %1935 = vmatpush1.bf16.msra.mxu0 %v1667
    %1936 = vmatprep.subr.bf16.mxu0 %v1670
    %1937 = vmatpush1.bf16.msra.mxu0 %v1669
    %1938 = vmatprep.subr.bf16.mxu0 %v1672
    %1939 = vmatpush1.bf16.msra.mxu0 %v1671
    %1940 = vmatprep.subr.bf16.mxu0 %v1674
    %1941 = vmatpush1.bf16.msra.mxu0 %v1673
    %1942 = vmatprep.subr.bf16.mxu0 %v1676
    %1943 = vmatpush1.bf16.msra.mxu0 %v1675
    %1944 = vmatprep.subr.bf16.mxu0 %v1678
    %1945 = vmatpush1.bf16.msra.mxu0 %v1677
    %1946 = vmatprep.subr.bf16.mxu0 %v1680
    %1947 = vmatpush1.bf16.msra.mxu0 %v1679
    %1948 = vmatprep.subr.bf16.mxu0 %v1682
    %1949 = vmatpush1.bf16.msra.mxu0 %v1681
    %1950 = vmatprep.subr.bf16.mxu0 %v1684
    %1951 = vmatpush1.bf16.msra.mxu0 %v1683
    %1952 = vmatprep.subr.bf16.mxu0 %v1686
    %1953 = vmatpush1.bf16.msra.mxu0 %v1685
    %1954 = vmatprep.subr.bf16.mxu0 %v1688
    %1955 = vmatpush1.bf16.msra.mxu0 %v1687
    %1956 = vmatprep.subr.bf16.mxu0 %v1690
    %1957 = vmatpush1.bf16.msra.mxu0 %v1689
    %1958 = vmatprep.mubr.bf16.mxu0 %v1098
    %1959 = vmatmul.mubr.bf16.gmra.mrb[0].mxu0 %v1097
    %v1960 = vpop.f32.mrb[0].mxu0
    %v1961 = vadd.f32 %v1918, %v1960
    %v1962 = vpop.f32.mrb[0].mxu0
    %v1963 = vadd.f32 %v1920, %v1962
    %v1964 = vpop.f32.mrb[0].mxu0
    %v1965 = vadd.f32 %v1922, %v1964
    %v1966 = vpop.f32.mrb[0].mxu0
    %v1967 = vadd.f32 %v1924, %v1966
    %1968 = vdwg.mxu0
    %1969 = vmatprep.subr.bf16.mxu0 %v1692
    %1970 = vmatpush1.bf16.msra.mxu0 %v1691
    %1971 = vmatprep.subr.bf16.mxu0 %v1694
    %1972 = vmatpush1.bf16.msra.mxu0 %v1693
    %1973 = vmatprep.subr.bf16.mxu0 %v1696
    %1974 = vmatpush1.bf16.msra.mxu0 %v1695
    %1975 = vmatprep.subr.bf16.mxu0 %v1698
    %1976 = vmatpush1.bf16.msra.mxu0 %v1697
    %1977 = vmatprep.subr.bf16.mxu0 %v1700
    %1978 = vmatpush1.bf16.msra.mxu0 %v1699
    %1979 = vmatprep.subr.bf16.mxu0 %v1702
    %1980 = vmatpush1.bf16.msra.mxu0 %v1701
    %1981 = vmatprep.subr.bf16.mxu0 %v1704
    %1982 = vmatpush1.bf16.msra.mxu0 %v1703
    %1983 = vmatprep.subr.bf16.mxu0 %v1706
    %1984 = vmatpush1.bf16.msra.mxu0 %v1705
    %1985 = vmatprep.subr.bf16.mxu0 %v1708
    %1986 = vmatpush1.bf16.msra.mxu0 %v1707
    %1987 = vmatprep.subr.bf16.mxu0 %v1710
    %1988 = vmatpush1.bf16.msra.mxu0 %v1709
    %1989 = vmatprep.subr.bf16.mxu0 %v1712
    %1990 = vmatpush1.bf16.msra.mxu0 %v1711
    %1991 = vmatprep.subr.bf16.mxu0 %v1714
    %1992 = vmatpush1.bf16.msra.mxu0 %v1713
    %1993 = vmatprep.subr.bf16.mxu0 %v1716
    %1994 = vmatpush1.bf16.msra.mxu0 %v1715
    %1995 = vmatprep.subr.bf16.mxu0 %v1718
    %1996 = vmatpush1.bf16.msra.mxu0 %v1717
    %1997 = vmatprep.subr.bf16.mxu0 %v1720
    %1998 = vmatpush1.bf16.msra.mxu0 %v1719
    %1999 = vmatprep.subr.bf16.mxu0 %v1722
    %2000 = vmatpush1.bf16.msra.mxu0 %v1721
    %2001 = vmatprep.mubr.bf16.mxu0 %v1100
    %2002 = vmatmul.mubr.bf16.gmra.mrb[0].mxu0 %v1099
    %v2003 = vpop.f32.mrb[0].mxu0
    %v2004 = vadd.f32 %v1961, %v2003
    %v2005 = vpop.f32.mrb[0].mxu0
    %v2006 = vadd.f32 %v1963, %v2005
    %v2007 = vpop.f32.mrb[0].mxu0
    %v2008 = vadd.f32 %v1965, %v2007
    %v2009 = vpop.f32.mrb[0].mxu0
    %v2010 = vadd.f32 %v1967, %v2009
    %2011 = vdwg.mxu0
    %2012 = vmatprep.subr.bf16.mxu0 %v1724
    %2013 = vmatpush1.bf16.msra.mxu0 %v1723
    %2014 = vmatprep.subr.bf16.mxu0 %v1726
    %2015 = vmatpush1.bf16.msra.mxu0 %v1725
    %2016 = vmatprep.subr.bf16.mxu0 %v1728
    %2017 = vmatpush1.bf16.msra.mxu0 %v1727
    %2018 = vmatprep.subr.bf16.mxu0 %v1730
    %2019 = vmatpush1.bf16.msra.mxu0 %v1729
    %2020 = vmatprep.subr.bf16.mxu0 %v1732
    %2021 = vmatpush1.bf16.msra.mxu0 %v1731
    %2022 = vmatprep.subr.bf16.mxu0 %v1734
    %2023 = vmatpush1.bf16.msra.mxu0 %v1733
    %2024 = vmatprep.subr.bf16.mxu0 %v1736
    %2025 = vmatpush1.bf16.msra.mxu0 %v1735
    %2026 = vmatprep.subr.bf16.mxu0 %v1738
    %2027 = vmatpush1.bf16.msra.mxu0 %v1737
    %2028 = vmatprep.subr.bf16.mxu0 %v1740
    %2029 = vmatpush1.bf16.msra.mxu0 %v1739
    %2030 = vmatprep.subr.bf16.mxu0 %v1742
    %2031 = vmatpush1.bf16.msra.mxu0 %v1741
    %2032 = vmatprep.subr.bf16.mxu0 %v1744
    %2033 = vmatpush1.bf16.msra.mxu0 %v1743
    %2034 = vmatprep.subr.bf16.mxu0 %v1746
    %2035 = vmatpush1.bf16.msra.mxu0 %v1745
    %2036 = vmatprep.subr.bf16.mxu0 %v1748
    %2037 = vmatpush1.bf16.msra.mxu0 %v1747
    %2038 = vmatprep.subr.bf16.mxu0 %v1750
    %2039 = vmatpush1.bf16.msra.mxu0 %v1749
    %2040 = vmatprep.subr.bf16.mxu0 %v1752
    %2041 = vmatpush1.bf16.msra.mxu0 %v1751
    %2042 = vmatprep.subr.bf16.mxu0 %v1754
    %2043 = vmatpush1.bf16.msra.mxu0 %v1753
    %2044 = vmatprep.mubr.bf16.mxu0 %v1102
    %2045 = vmatmul.mubr.bf16.gmra.mrb[0].mxu0 %v1101
    %v2046 = vpop.f32.mrb[0].mxu0
    %v2047 = vadd.f32 %v2004, %v2046
    %v2048 = vpop.f32.mrb[0].mxu0
    %v2049 = vadd.f32 %v2006, %v2048
    %v2050 = vpop.f32.mrb[0].mxu0
    %v2051 = vadd.f32 %v2008, %v2050
    %v2052 = vpop.f32.mrb[0].mxu0
    %v2053 = vadd.f32 %v2010, %v2052
    %2054 = vdwg.mxu0
    %2055 = vst [vmem:[#allocation11] sm:$0xff] %v2047
    %2056 = vst [vmem:[#allocation11 + $0x8] sm:$0xff] %v2049
    %2057 = vst [vmem:[#allocation11 + $0x10] sm:$0xff] %v2051
    %2058 = vst [vmem:[#allocation11 + $0x18] sm:$0xff] %v2053
    // Predicated region
    $region42: #{tpu_custom_call.1} parent=1 // pred_check
      _
    $region43: #{tpu_custom_call.1} parent=1 // pred_check_branch
      %2060 = sbr.rel (0) target = $region45
    $region44: #{tpu_custom_call.1} parent=1 // pred_region
      %s2062 = ssub.s32 512, 512
      %2063 = vsyncadd [#allocation4], %s2062
      %s2064 = sshll.u32 [#allocation11], 4
      %s2065 = int_to_ptr.vmem [resolvable:$true] %s2064
      %2070 = dma.vmem_to_hbm [thread:$0]  %s2065, 512, %s5, [#allocation4], 256, 256, 16
    $region45: #{tpu_custom_call.1} parent=1 // pred_fallthru
      _
    // Predicated region
    $region46: #{tpu_custom_call.1} parent=1 // pred_check
      _
    $region47: #{tpu_custom_call.1} parent=1 // pred_check_branch
      %2072 = sbr.rel (0) target = $region49
    $region48: #{tpu_custom_call.1} parent=1 // pred_region
      %2073 = dma.done [#allocation4], 512
    $region49: #{tpu_custom_call.1} parent=1 // pred_fallthru
      _
    %2074 = vsyncpa [#allocation3], 1
    %2075 = vsyncpa [#allocation6], 1
    %2076 = vsyncpa [#allocation9], 1
    %2077 = vsyncpa [#allocation4], 1

</llo_original>
